<compile_context>
chip_gen: v7x
topology: tpu7x:2x2x1
jax: 0.10.0
libtpu: 0.0.40
codegen_flags: <defaults>
</compile_context>

<pallas_src>
import jax
import jax.numpy as jnp
from jax.experimental import pallas as pl
from jax.experimental.pallas import tpu as pltpu

C_IN = 3
C_OUT = 64
N_CLASSES = 10
KSIZE = 3
K_TAPS = KSIZE * KSIZE * C_IN   # 27 real conv taps
K_PAD = 32                      # contraction dim padded to a clean multiple of 8
BT = 8                          # images per grid step


def _make_net_kernel(bt, hw):
    def net_kernel(x_ref, wconv_ref, wfc_ref, o_ref):
        # x_ref:     (bt, hw, K_PAD)     im2col patches (+ ones column for bias)
        # wconv_ref: (K_PAD, C_OUT)      packed conv weight, bias folded in row 27
        # wfc_ref:   (C_OUT, N_CLASSES)  fc weight (already transposed)
        # o_ref:     (bt, N_CLASSES)
        patches = x_ref[...].reshape(bt * hw, K_PAD)

        # Conv (+ bias via the ones column) as one im2col MXU matmul, then ReLU.
        conv = jnp.dot(patches, wconv_ref[...],
                       preferred_element_type=jnp.float32)          # (bt*hw, 64)
        act = jnp.maximum(conv, 0.0)

        # AdaptiveMaxPool2d(1): per-image global spatial max per channel.
        pooled = jnp.max(act.reshape(bt, hw, C_OUT), axis=1)        # (bt, 64)

        # Linear(64 -> 10, bias=False) once per block.
        o_ref[...] = jnp.dot(pooled, wfc_ref[...],
                             preferred_element_type=jnp.float32)    # (bt, 10)

    return net_kernel


@jax.jit
def net_forward(x_nchw, w_conv_oihw, b_conv, w_fc):
    """x_nchw: (B, 3, H, W) float32; returns (B, 10) float32."""
    B, C, H, W = x_nchw.shape
    assert C == C_IN
    HW = H * W

    # ---- wrapper-side glue: layout, zero-pad, im2col, weight packing ----
    x_nhwc = jnp.transpose(x_nchw, (0, 2, 3, 1)).astype(jnp.float32)
    x_pad = jnp.pad(x_nhwc, ((0, 0), (1, 1), (1, 1), (0, 0)))       # (B, H+2, W+2, 3)

    # im2col: tap ordering is (dy, dx, cin), matching the packed weight below.
    taps = [x_pad[:, dy:dy + H, dx:dx + W, :]
            for dy in range(KSIZE) for dx in range(KSIZE)]
    patches = jnp.stack(taps, axis=3)                               # (B, H, W, 9, 3)
    patches = patches.reshape(B, HW, K_TAPS)
    # Ones column (folds conv bias into the matmul) + zero pad of K to 32.
    ones_col = jnp.ones((B, HW, 1), jnp.float32)
    patches = jnp.concatenate([patches, ones_col], axis=-1)         # (B, HW, 28)
    patches = jnp.pad(patches, ((0, 0), (0, 0), (0, K_PAD - K_TAPS - 1)))

    # Edge-pad HW to a multiple of 8 (row duplication keeps the max-pool exact).
    pad_hw = (-HW) % 8
    if pad_hw:
        patches = jnp.pad(patches, ((0, 0), (0, pad_hw), (0, 0)), mode="edge")
    HWp = HW + pad_hw

    # Pad batch to a multiple of BT so every grid step gets a full block.
    pad_b = (-B) % BT
    if pad_b:
        patches = jnp.pad(patches, ((0, pad_b), (0, 0), (0, 0)))
    Bp = B + pad_b

    # Conv weight OIHW -> (ky, kx, cin, cout) -> (27, 64); bias in row 27; pad to 32.
    w_conv_packed = jnp.transpose(w_conv_oihw, (2, 3, 1, 0)).reshape(K_TAPS, C_OUT)
    w_conv_packed = jnp.concatenate(
        [w_conv_packed.astype(jnp.float32), b_conv.reshape(1, C_OUT).astype(jnp.float32)],
        axis=0)                                                      # (28, 64)
    w_conv_packed = jnp.pad(w_conv_packed, ((0, K_PAD - K_TAPS - 1), (0, 0)))
    w_fc_t = jnp.transpose(w_fc).astype(jnp.float32)                 # (64, 10)

    out = pl.pallas_call(
        _make_net_kernel(BT, HWp),
        out_shape=jax.ShapeDtypeStruct((Bp, N_CLASSES), jnp.float32),
        grid=(Bp // BT,),
        in_specs=[
            pl.BlockSpec((BT, HWp, K_PAD), lambda b: (b, 0, 0)),
            pl.BlockSpec((K_PAD, C_OUT), lambda b: (0, 0)),
            pl.BlockSpec((C_OUT, N_CLASSES), lambda b: (0, 0)),
        ],
        out_specs=pl.BlockSpec((BT, N_CLASSES), lambda b: (b, 0)),
        compiler_params=pltpu.CompilerParams(
            dimension_semantics=("parallel",)),
    )(patches, w_conv_packed, w_fc_t)

    return out[:B]


def _reference_forward(x_nchw, w_conv_oihw, b_conv, w_fc):
    """Pure-JAX reference matching the PyTorch forward exactly."""
    conv = jax.lax.conv_general_dilated(
        x_nchw, w_conv_oihw, window_strides=(1, 1), padding="SAME",
        dimension_numbers=("NCHW", "OIHW", "NCHW"))
    conv = conv + b_conv[None, :, None, None]
    relu = jnp.maximum(conv, 0.0)
    pool = jnp.max(relu, axis=(2, 3))        # AdaptiveMaxPool2d(1) + Flatten
    return pool @ w_fc.T                     # Linear(64, 10, bias=False)


if __name__ == "__main__":
    key = jax.random.PRNGKey(0)
    k_wc, k_bc, k_fc, k_x = jax.random.split(key, 4)

    # Deterministic synthetic parameters (shapes from the module __init__).
    w_conv = jax.random.normal(k_wc, (C_OUT, C_IN, KSIZE, KSIZE), jnp.float32) * 0.1
    b_conv = jax.random.normal(k_bc, (C_OUT,), jnp.float32) * 0.1
    w_fc = jax.random.normal(k_fc, (N_CLASSES, C_OUT), jnp.float32) * 0.1

    # Small example input consistent with the module (NCHW, 3 input channels).
    x = jax.random.normal(k_x, (2, C_IN, 16, 16), jnp.float32)

    out = net_forward(x, w_conv, b_conv, w_fc)
    out = jax.block_until_ready(out)

    ref = _reference_forward(x, w_conv, b_conv, w_fc)
    if not jnp.allclose(out, ref, atol=1e-4, rtol=1e-4):
        raise AssertionError("Pallas kernel output mismatch vs reference")

    print("KERNEL_OK")
</pallas_src>

<mosaic_0001>
module attributes {stable_mosaic.version = 11 : i64} {
  func.func @net_kernel(%arg0: i32, %arg1: memref<8x256x32xf32, #tpu.memory_space<vmem>>, %arg2: memref<32x64xf32, #tpu.memory_space<vmem>>, %arg3: memref<64x10xf32, #tpu.memory_space<vmem>>, %arg4: memref<8x10xf32, #tpu.memory_space<vmem>>) attributes {dimension_semantics = [#tpu.dimension_semantics<parallel>], iteration_bounds = array<i64: 1>, scalar_prefetch = 0 : i64, scratch_operands = 0 : i64, tpu.core_type = #tpu.core_type<tc>, window_params = [{transform_indices = @transform_0, window_bounds = array<i64: 8, 256, 32>}, {pipeline_mode = #tpu.pipeline_mode<synchronous>, transform_indices = @transform_1, window_bounds = array<i64: 32, 64>}, {pipeline_mode = #tpu.pipeline_mode<synchronous>, transform_indices = @transform_2, window_bounds = array<i64: 64, 10>}, {transform_indices = @transform_3, window_bounds = array<i64: 8, 10>}]} {
    %c0 = arith.constant 0 : index
    %c0_0 = arith.constant 0 : index
    %c0_1 = arith.constant 0 : index
    %0 = vector.load %arg1[%c0, %c0_0, %c0_1] : memref<8x256x32xf32, #tpu.memory_space<vmem>>, vector<8x256x32xf32>
    %1 = vector.shape_cast %0 : vector<8x256x32xf32> to vector<2048x32xf32>
    %c0_2 = arith.constant 0 : index
    %c0_3 = arith.constant 0 : index
    %2 = vector.load %arg2[%c0_2, %c0_3] : memref<32x64xf32, #tpu.memory_space<vmem>>, vector<32x64xf32>
    %cst = arith.constant dense<0.000000e+00> : vector<2048x64xf32>
    %3 = tpu.matmul %1, %2, %cst {dimension_numbers = #tpu.dot_dimension_numbers<[1], [0], [0], [1], [0, 0, 1, 1], [], []>} : vector<2048x32xf32>, vector<32x64xf32>, vector<2048x64xf32> -> vector<2048x64xf32>
    %cst_4 = arith.constant 0.000000e+00 : f32
    %4 = vector.broadcast %cst_4 : f32 to vector<2048x64xf32>
    %5 = arith.maximumf %3, %4 : vector<2048x64xf32>
    %6 = vector.shape_cast %5 : vector<2048x64xf32> to vector<8x256x64xf32>
    %cst_5 = arith.constant dense<0xFF800000> : vector<8x64xf32>
    %7 = vector.multi_reduction <maximumf>, %6, %cst_5 [1] : vector<8x256x64xf32> to vector<8x64xf32>
    %c0_6 = arith.constant 0 : index
    %c0_7 = arith.constant 0 : index
    %8 = vector.load %arg3[%c0_6, %c0_7] : memref<64x10xf32, #tpu.memory_space<vmem>>, vector<64x10xf32>
    %cst_8 = arith.constant dense<0.000000e+00> : vector<8x10xf32>
    %9 = tpu.matmul %7, %8, %cst_8 {dimension_numbers = #tpu.dot_dimension_numbers<[1], [0], [0], [1], [0, 0, 1, 1], [], []>} : vector<8x64xf32>, vector<64x10xf32>, vector<8x10xf32> -> vector<8x10xf32>
    %c0_9 = arith.constant 0 : index
    %c0_10 = arith.constant 0 : index
    %10 = vector.load %arg4[%c0_9, %c0_10] : memref<8x10xf32, #tpu.memory_space<vmem>>, vector<8x10xf32>
    tpu.vector_store %arg4[%c0_9, %c0_10], %9 {strides = array<i32>} : memref<8x10xf32, #tpu.memory_space<vmem>>, vector<8x10xf32>,
    return
  }
  func.func @transform_0(%arg0: i32) -> (i32, i32, i32) {
    %c0_i32 = arith.constant 0 : i32
    %c0_i32_0 = arith.constant 0 : i32
    %c0_i32_1 = arith.constant 0 : i32
    return %arg0, %c0_i32, %c0_i32_0 : i32, i32, i32
  }
  func.func @transform_1(%arg0: i32) -> (i32, i32) {
    %c0_i32 = arith.constant 0 : i32
    %c0_i32_0 = arith.constant 0 : i32
    %c0_i32_1 = arith.constant 0 : i32
    return %c0_i32, %c0_i32_0 : i32, i32
  }
  func.func @transform_2(%arg0: i32) -> (i32, i32) {
    %c0_i32 = arith.constant 0 : i32
    %c0_i32_0 = arith.constant 0 : i32
    %c0_i32_1 = arith.constant 0 : i32
    return %c0_i32, %c0_i32_0 : i32, i32
  }
  func.func @transform_3(%arg0: i32) -> (i32, i32) {
    %c0_i32 = arith.constant 0 : i32
    %c0_i32_0 = arith.constant 0 : i32
    return %arg0, %c0_i32 : i32, i32
  }
}

</mosaic_0001>

<llo_original>
// kernel: net_forward.1
$region0: #{net_forward.1}
  #allocation0 [shape = 'u32[]', space=smem, size = 0x4, offset = 0x4, fixed_abs, tag = 'smem constant byte address 0x4 - core index']
  #allocation1 [shape = 'u32[144,128]{1,0:T(1,128)}', space=vmem, size = 0x12000, scoped, tag = 'internal scratch']
  %s0 = inlined_call_operand.vmem [shape: f32[8,256,32], index: 0, kind: input, shape index: {}]
  %s1 = inlined_call_operand.vmem [shape: f32[32,64], index: 1, kind: input, shape index: {}]
  %s2 = inlined_call_operand.vmem [shape: f32[64,10], index: 2, kind: input, shape index: {}]
  %s3 = inlined_call_operand.vmem [shape: f32[8,10], index: 3, kind: output, shape index: {}]
  %s4 = sld [smem:[#allocation0]]
  $region22: #{net_forward.1} parent=0
    _
  %s6 = ssub.s32 1, %s4
  %s7 = scalar_select 0, %s6, %s4
  // Predicated region
  $region2: #{net_forward.1} parent=0 // pred_check
    _
  $region3: #{net_forward.1} parent=0 // pred_check_branch
    %9 = sbr.rel (0) target = $region5
  $region4: #{net_forward.1} parent=0 // pred_region
    _
  $region5: #{net_forward.1} parent=0 // pred_fallthru
    _
  // Predicated region
  $region6: #{net_forward.1} parent=0 // pred_check
    _
  $region7: #{net_forward.1} parent=0 // pred_check_branch
    %11 = sbr.rel (0) target = $region9
  $region8: #{net_forward.1} parent=0 // pred_region
    _
  $region9: #{net_forward.1} parent=0 // pred_fallthru
    _
  // Predicated region
  $region10: #{net_forward.1} parent=0 // pred_check
    _
  $region11: #{net_forward.1} parent=0 // pred_check_branch
    %13 = sbr.rel (0) target = $region13
  $region12: #{net_forward.1} parent=0 // pred_region
    _
  $region13: #{net_forward.1} parent=0 // pred_fallthru
    _
  %v14 = vld [vmem:[%s0] sm:$0xff]
  %v15 = vld [vmem:[%s0 + $0x8] sm:$0xff]
  %v16 = vld [vmem:[%s0 + $0x10] sm:$0xff]
  %v17 = vld [vmem:[%s0 + $0x18] sm:$0xff]
  %v18 = vld [vmem:[%s0 + $0x20] sm:$0xff]
  %v19 = vld [vmem:[%s0 + $0x28] sm:$0xff]
  %v20 = vld [vmem:[%s0 + $0x30] sm:$0xff]
  %v21 = vld [vmem:[%s0 + $0x38] sm:$0xff]
  %v22 = vld [vmem:[%s0 + $0x40] sm:$0xff]
  %v23 = vld [vmem:[%s0 + $0x48] sm:$0xff]
  %v24 = vld [vmem:[%s0 + $0x50] sm:$0xff]
  %v25 = vld [vmem:[%s0 + $0x58] sm:$0xff]
  %v26 = vld [vmem:[%s0 + $0x60] sm:$0xff]
  %v27 = vld [vmem:[%s0 + $0x68] sm:$0xff]
  %v28 = vld [vmem:[%s0 + $0x70] sm:$0xff]
  %v29 = vld [vmem:[%s0 + $0x78] sm:$0xff]
  %v30 = vld [vmem:[%s0 + $0x80] sm:$0xff]
  %v31 = vld [vmem:[%s0 + $0x88] sm:$0xff]
  %v32 = vld [vmem:[%s0 + $0x90] sm:$0xff]
  %v33 = vld [vmem:[%s0 + $0x98] sm:$0xff]
  %v34 = vld [vmem:[%s0 + $0xa0] sm:$0xff]
  %v35 = vld [vmem:[%s0 + $0xa8] sm:$0xff]
  %v36 = vld [vmem:[%s0 + $0xb0] sm:$0xff]
  %v37 = vld [vmem:[%s0 + $0xb8] sm:$0xff]
  %v38 = vld [vmem:[%s0 + $0xc0] sm:$0xff]
  %v39 = vld [vmem:[%s0 + $0xc8] sm:$0xff]
  %v40 = vld [vmem:[%s0 + $0xd0] sm:$0xff]
  %v41 = vld [vmem:[%s0 + $0xd8] sm:$0xff]
  %v42 = vld [vmem:[%s0 + $0xe0] sm:$0xff]
  %v43 = vld [vmem:[%s0 + $0xe8] sm:$0xff]
  %v44 = vld [vmem:[%s0 + $0xf0] sm:$0xff]
  %v45 = vld [vmem:[%s0 + $0xf8] sm:$0xff]
  %v46 = vld [vmem:[%s0 + $0x100] sm:$0xff]
  %v47 = vld [vmem:[%s0 + $0x108] sm:$0xff]
  %v48 = vld [vmem:[%s0 + $0x110] sm:$0xff]
  %v49 = vld [vmem:[%s0 + $0x118] sm:$0xff]
  %v50 = vld [vmem:[%s0 + $0x120] sm:$0xff]
  %v51 = vld [vmem:[%s0 + $0x128] sm:$0xff]
  %v52 = vld [vmem:[%s0 + $0x130] sm:$0xff]
  %v53 = vld [vmem:[%s0 + $0x138] sm:$0xff]
  %v54 = vld [vmem:[%s0 + $0x140] sm:$0xff]
  %v55 = vld [vmem:[%s0 + $0x148] sm:$0xff]
  %v56 = vld [vmem:[%s0 + $0x150] sm:$0xff]
  %v57 = vld [vmem:[%s0 + $0x158] sm:$0xff]
  %v58 = vld [vmem:[%s0 + $0x160] sm:$0xff]
  %v59 = vld [vmem:[%s0 + $0x168] sm:$0xff]
  %v60 = vld [vmem:[%s0 + $0x170] sm:$0xff]
  %v61 = vld [vmem:[%s0 + $0x178] sm:$0xff]
  %v62 = vld [vmem:[%s0 + $0x180] sm:$0xff]
  %v63 = vld [vmem:[%s0 + $0x188] sm:$0xff]
  %v64 = vld [vmem:[%s0 + $0x190] sm:$0xff]
  %v65 = vld [vmem:[%s0 + $0x198] sm:$0xff]
  %v66 = vld [vmem:[%s0 + $0x1a0] sm:$0xff]
  %v67 = vld [vmem:[%s0 + $0x1a8] sm:$0xff]
  %v68 = vld [vmem:[%s0 + $0x1b0] sm:$0xff]
  %v69 = vld [vmem:[%s0 + $0x1b8] sm:$0xff]
  %v70 = vld [vmem:[%s0 + $0x1c0] sm:$0xff]
  %v71 = vld [vmem:[%s0 + $0x1c8] sm:$0xff]
  %v72 = vld [vmem:[%s0 + $0x1d0] sm:$0xff]
  %v73 = vld [vmem:[%s0 + $0x1d8] sm:$0xff]
  %v74 = vld [vmem:[%s0 + $0x1e0] sm:$0xff]
  %v75 = vld [vmem:[%s0 + $0x1e8] sm:$0xff]
  %v76 = vld [vmem:[%s0 + $0x1f0] sm:$0xff]
  %v77 = vld [vmem:[%s0 + $0x1f8] sm:$0xff]
  %v78 = vld [vmem:[%s0 + $0x200] sm:$0xff]
  %v79 = vld [vmem:[%s0 + $0x208] sm:$0xff]
  %v80 = vld [vmem:[%s0 + $0x210] sm:$0xff]
  %v81 = vld [vmem:[%s0 + $0x218] sm:$0xff]
  %v82 = vld [vmem:[%s0 + $0x220] sm:$0xff]
  %v83 = vld [vmem:[%s0 + $0x228] sm:$0xff]
  %v84 = vld [vmem:[%s0 + $0x230] sm:$0xff]
  %v85 = vld [vmem:[%s0 + $0x238] sm:$0xff]
  %v86 = vld [vmem:[%s0 + $0x240] sm:$0xff]
  %v87 = vld [vmem:[%s0 + $0x248] sm:$0xff]
  %v88 = vld [vmem:[%s0 + $0x250] sm:$0xff]
  %v89 = vld [vmem:[%s0 + $0x258] sm:$0xff]
  %v90 = vld [vmem:[%s0 + $0x260] sm:$0xff]
  %v91 = vld [vmem:[%s0 + $0x268] sm:$0xff]
  %v92 = vld [vmem:[%s0 + $0x270] sm:$0xff]
  %v93 = vld [vmem:[%s0 + $0x278] sm:$0xff]
  %v94 = vld [vmem:[%s0 + $0x280] sm:$0xff]
  %v95 = vld [vmem:[%s0 + $0x288] sm:$0xff]
  %v96 = vld [vmem:[%s0 + $0x290] sm:$0xff]
  %v97 = vld [vmem:[%s0 + $0x298] sm:$0xff]
  %v98 = vld [vmem:[%s0 + $0x2a0] sm:$0xff]
  %v99 = vld [vmem:[%s0 + $0x2a8] sm:$0xff]
  %v100 = vld [vmem:[%s0 + $0x2b0] sm:$0xff]
  %v101 = vld [vmem:[%s0 + $0x2b8] sm:$0xff]
  %v102 = vld [vmem:[%s0 + $0x2c0] sm:$0xff]
  %v103 = vld [vmem:[%s0 + $0x2c8] sm:$0xff]
  %v104 = vld [vmem:[%s0 + $0x2d0] sm:$0xff]
  %v105 = vld [vmem:[%s0 + $0x2d8] sm:$0xff]
  %v106 = vld [vmem:[%s0 + $0x2e0] sm:$0xff]
  %v107 = vld [vmem:[%s0 + $0x2e8] sm:$0xff]
  %v108 = vld [vmem:[%s0 + $0x2f0] sm:$0xff]
  %v109 = vld [vmem:[%s0 + $0x2f8] sm:$0xff]
  %v110 = vld [vmem:[%s0 + $0x300] sm:$0xff]
  %v111 = vld [vmem:[%s0 + $0x308] sm:$0xff]
  %v112 = vld [vmem:[%s0 + $0x310] sm:$0xff]
  %v113 = vld [vmem:[%s0 + $0x318] sm:$0xff]
  %v114 = vld [vmem:[%s0 + $0x320] sm:$0xff]
  %v115 = vld [vmem:[%s0 + $0x328] sm:$0xff]
  %v116 = vld [vmem:[%s0 + $0x330] sm:$0xff]
  %v117 = vld [vmem:[%s0 + $0x338] sm:$0xff]
  %v118 = vld [vmem:[%s0 + $0x340] sm:$0xff]
  %v119 = vld [vmem:[%s0 + $0x348] sm:$0xff]
  %v120 = vld [vmem:[%s0 + $0x350] sm:$0xff]
  %v121 = vld [vmem:[%s0 + $0x358] sm:$0xff]
  %v122 = vld [vmem:[%s0 + $0x360] sm:$0xff]
  %v123 = vld [vmem:[%s0 + $0x368] sm:$0xff]
  %v124 = vld [vmem:[%s0 + $0x370] sm:$0xff]
  %v125 = vld [vmem:[%s0 + $0x378] sm:$0xff]
  %v126 = vld [vmem:[%s0 + $0x380] sm:$0xff]
  %v127 = vld [vmem:[%s0 + $0x388] sm:$0xff]
  %v128 = vld [vmem:[%s0 + $0x390] sm:$0xff]
  %v129 = vld [vmem:[%s0 + $0x398] sm:$0xff]
  %v130 = vld [vmem:[%s0 + $0x3a0] sm:$0xff]
  %v131 = vld [vmem:[%s0 + $0x3a8] sm:$0xff]
  %v132 = vld [vmem:[%s0 + $0x3b0] sm:$0xff]
  %v133 = vld [vmem:[%s0 + $0x3b8] sm:$0xff]
  %v134 = vld [vmem:[%s0 + $0x3c0] sm:$0xff]
  %v135 = vld [vmem:[%s0 + $0x3c8] sm:$0xff]
  %v136 = vld [vmem:[%s0 + $0x3d0] sm:$0xff]
  %v137 = vld [vmem:[%s0 + $0x3d8] sm:$0xff]
  %v138 = vld [vmem:[%s0 + $0x3e0] sm:$0xff]
  %v139 = vld [vmem:[%s0 + $0x3e8] sm:$0xff]
  %v140 = vld [vmem:[%s0 + $0x3f0] sm:$0xff]
  %v141 = vld [vmem:[%s0 + $0x3f8] sm:$0xff]
  %v142 = vld [vmem:[%s0 + $0x400] sm:$0xff]
  %v143 = vld [vmem:[%s0 + $0x408] sm:$0xff]
  %v144 = vld [vmem:[%s0 + $0x410] sm:$0xff]
  %v145 = vld [vmem:[%s0 + $0x418] sm:$0xff]
  %v146 = vld [vmem:[%s0 + $0x420] sm:$0xff]
  %v147 = vld [vmem:[%s0 + $0x428] sm:$0xff]
  %v148 = vld [vmem:[%s0 + $0x430] sm:$0xff]
  %v149 = vld [vmem:[%s0 + $0x438] sm:$0xff]
  %v150 = vld [vmem:[%s0 + $0x440] sm:$0xff]
  %v151 = vld [vmem:[%s0 + $0x448] sm:$0xff]
  %v152 = vld [vmem:[%s0 + $0x450] sm:$0xff]
  %v153 = vld [vmem:[%s0 + $0x458] sm:$0xff]
  %v154 = vld [vmem:[%s0 + $0x460] sm:$0xff]
  %v155 = vld [vmem:[%s0 + $0x468] sm:$0xff]
  %v156 = vld [vmem:[%s0 + $0x470] sm:$0xff]
  %v157 = vld [vmem:[%s0 + $0x478] sm:$0xff]
  %v158 = vld [vmem:[%s0 + $0x480] sm:$0xff]
  %v159 = vld [vmem:[%s0 + $0x488] sm:$0xff]
  %v160 = vld [vmem:[%s0 + $0x490] sm:$0xff]
  %v161 = vld [vmem:[%s0 + $0x498] sm:$0xff]
  %v162 = vld [vmem:[%s0 + $0x4a0] sm:$0xff]
  %v163 = vld [vmem:[%s0 + $0x4a8] sm:$0xff]
  %v164 = vld [vmem:[%s0 + $0x4b0] sm:$0xff]
  %v165 = vld [vmem:[%s0 + $0x4b8] sm:$0xff]
  %v166 = vld [vmem:[%s0 + $0x4c0] sm:$0xff]
  %v167 = vld [vmem:[%s0 + $0x4c8] sm:$0xff]
  %v168 = vld [vmem:[%s0 + $0x4d0] sm:$0xff]
  %v169 = vld [vmem:[%s0 + $0x4d8] sm:$0xff]
  %v170 = vld [vmem:[%s0 + $0x4e0] sm:$0xff]
  %v171 = vld [vmem:[%s0 + $0x4e8] sm:$0xff]
  %v172 = vld [vmem:[%s0 + $0x4f0] sm:$0xff]
  %v173 = vld [vmem:[%s0 + $0x4f8] sm:$0xff]
  %v174 = vld [vmem:[%s0 + $0x500] sm:$0xff]
  %v175 = vld [vmem:[%s0 + $0x508] sm:$0xff]
  %v176 = vld [vmem:[%s0 + $0x510] sm:$0xff]
  %v177 = vld [vmem:[%s0 + $0x518] sm:$0xff]
  %v178 = vld [vmem:[%s0 + $0x520] sm:$0xff]
  %v179 = vld [vmem:[%s0 + $0x528] sm:$0xff]
  %v180 = vld [vmem:[%s0 + $0x530] sm:$0xff]
  %v181 = vld [vmem:[%s0 + $0x538] sm:$0xff]
  %v182 = vld [vmem:[%s0 + $0x540] sm:$0xff]
  %v183 = vld [vmem:[%s0 + $0x548] sm:$0xff]
  %v184 = vld [vmem:[%s0 + $0x550] sm:$0xff]
  %v185 = vld [vmem:[%s0 + $0x558] sm:$0xff]
  %v186 = vld [vmem:[%s0 + $0x560] sm:$0xff]
  %v187 = vld [vmem:[%s0 + $0x568] sm:$0xff]
  %v188 = vld [vmem:[%s0 + $0x570] sm:$0xff]
  %v189 = vld [vmem:[%s0 + $0x578] sm:$0xff]
  %v190 = vld [vmem:[%s0 + $0x580] sm:$0xff]
  %v191 = vld [vmem:[%s0 + $0x588] sm:$0xff]
  %v192 = vld [vmem:[%s0 + $0x590] sm:$0xff]
  %v193 = vld [vmem:[%s0 + $0x598] sm:$0xff]
  %v194 = vld [vmem:[%s0 + $0x5a0] sm:$0xff]
  %v195 = vld [vmem:[%s0 + $0x5a8] sm:$0xff]
  %v196 = vld [vmem:[%s0 + $0x5b0] sm:$0xff]
  %v197 = vld [vmem:[%s0 + $0x5b8] sm:$0xff]
  %v198 = vld [vmem:[%s0 + $0x5c0] sm:$0xff]
  %v199 = vld [vmem:[%s0 + $0x5c8] sm:$0xff]
  %v200 = vld [vmem:[%s0 + $0x5d0] sm:$0xff]
  %v201 = vld [vmem:[%s0 + $0x5d8] sm:$0xff]
  %v202 = vld [vmem:[%s0 + $0x5e0] sm:$0xff]
  %v203 = vld [vmem:[%s0 + $0x5e8] sm:$0xff]
  %v204 = vld [vmem:[%s0 + $0x5f0] sm:$0xff]
  %v205 = vld [vmem:[%s0 + $0x5f8] sm:$0xff]
  %v206 = vld [vmem:[%s0 + $0x600] sm:$0xff]
  %v207 = vld [vmem:[%s0 + $0x608] sm:$0xff]
  %v208 = vld [vmem:[%s0 + $0x610] sm:$0xff]
  %v209 = vld [vmem:[%s0 + $0x618] sm:$0xff]
  %v210 = vld [vmem:[%s0 + $0x620] sm:$0xff]
  %v211 = vld [vmem:[%s0 + $0x628] sm:$0xff]
  %v212 = vld [vmem:[%s0 + $0x630] sm:$0xff]
  %v213 = vld [vmem:[%s0 + $0x638] sm:$0xff]
  %v214 = vld [vmem:[%s0 + $0x640] sm:$0xff]
  %v215 = vld [vmem:[%s0 + $0x648] sm:$0xff]
  %v216 = vld [vmem:[%s0 + $0x650] sm:$0xff]
  %v217 = vld [vmem:[%s0 + $0x658] sm:$0xff]
  %v218 = vld [vmem:[%s0 + $0x660] sm:$0xff]
  %v219 = vld [vmem:[%s0 + $0x668] sm:$0xff]
  %v220 = vld [vmem:[%s0 + $0x670] sm:$0xff]
  %v221 = vld [vmem:[%s0 + $0x678] sm:$0xff]
  %v222 = vld [vmem:[%s0 + $0x680] sm:$0xff]
  %v223 = vld [vmem:[%s0 + $0x688] sm:$0xff]
  %v224 = vld [vmem:[%s0 + $0x690] sm:$0xff]
  %v225 = vld [vmem:[%s0 + $0x698] sm:$0xff]
  %v226 = vld [vmem:[%s0 + $0x6a0] sm:$0xff]
  %v227 = vld [vmem:[%s0 + $0x6a8] sm:$0xff]
  %v228 = vld [vmem:[%s0 + $0x6b0] sm:$0xff]
  %v229 = vld [vmem:[%s0 + $0x6b8] sm:$0xff]
  %v230 = vld [vmem:[%s0 + $0x6c0] sm:$0xff]
  %v231 = vld [vmem:[%s0 + $0x6c8] sm:$0xff]
  %v232 = vld [vmem:[%s0 + $0x6d0] sm:$0xff]
  %v233 = vld [vmem:[%s0 + $0x6d8] sm:$0xff]
  %v234 = vld [vmem:[%s0 + $0x6e0] sm:$0xff]
  %v235 = vld [vmem:[%s0 + $0x6e8] sm:$0xff]
  %v236 = vld [vmem:[%s0 + $0x6f0] sm:$0xff]
  %v237 = vld [vmem:[%s0 + $0x6f8] sm:$0xff]
  %v238 = vld [vmem:[%s0 + $0x700] sm:$0xff]
  %v239 = vld [vmem:[%s0 + $0x708] sm:$0xff]
  %v240 = vld [vmem:[%s0 + $0x710] sm:$0xff]
  %v241 = vld [vmem:[%s0 + $0x718] sm:$0xff]
  %v242 = vld [vmem:[%s0 + $0x720] sm:$0xff]
  %v243 = vld [vmem:[%s0 + $0x728] sm:$0xff]
  %v244 = vld [vmem:[%s0 + $0x730] sm:$0xff]
  %v245 = vld [vmem:[%s0 + $0x738] sm:$0xff]
  %v246 = vld [vmem:[%s0 + $0x740] sm:$0xff]
  %v247 = vld [vmem:[%s0 + $0x748] sm:$0xff]
  %v248 = vld [vmem:[%s0 + $0x750] sm:$0xff]
  %v249 = vld [vmem:[%s0 + $0x758] sm:$0xff]
  %v250 = vld [vmem:[%s0 + $0x760] sm:$0xff]
  %v251 = vld [vmem:[%s0 + $0x768] sm:$0xff]
  %v252 = vld [vmem:[%s0 + $0x770] sm:$0xff]
  %v253 = vld [vmem:[%s0 + $0x778] sm:$0xff]
  %v254 = vld [vmem:[%s0 + $0x780] sm:$0xff]
  %v255 = vld [vmem:[%s0 + $0x788] sm:$0xff]
  %v256 = vld [vmem:[%s0 + $0x790] sm:$0xff]
  %v257 = vld [vmem:[%s0 + $0x798] sm:$0xff]
  %v258 = vld [vmem:[%s0 + $0x7a0] sm:$0xff]
  %v259 = vld [vmem:[%s0 + $0x7a8] sm:$0xff]
  %v260 = vld [vmem:[%s0 + $0x7b0] sm:$0xff]
  %v261 = vld [vmem:[%s0 + $0x7b8] sm:$0xff]
  %v262 = vld [vmem:[%s0 + $0x7c0] sm:$0xff]
  %v263 = vld [vmem:[%s0 + $0x7c8] sm:$0xff]
  %v264 = vld [vmem:[%s0 + $0x7d0] sm:$0xff]
  %v265 = vld [vmem:[%s0 + $0x7d8] sm:$0xff]
  %v266 = vld [vmem:[%s0 + $0x7e0] sm:$0xff]
  %v267 = vld [vmem:[%s0 + $0x7e8] sm:$0xff]
  %v268 = vld [vmem:[%s0 + $0x7f0] sm:$0xff]
  %v269 = vld [vmem:[%s0 + $0x7f8] sm:$0xff]
  %v270 = vld [vmem:[%s1] sm:$0xff]
  %v271 = vld [vmem:[%s1 + $0x8] sm:$0xff]
  %v272 = vld [vmem:[%s1 + $0x10] sm:$0xff]
  %v273 = vld [vmem:[%s1 + $0x18] sm:$0xff]
  %vm274 = vcmask 261120
  %v276 = vsel %vm274, %v14, 0
  %v279 = vsel %vm274, %v15, 0
  %v282 = vsel %vm274, %v16, 0
  %v285 = vsel %vm274, %v17, 0
  %v288 = vsel %vm274, %v18, 0
  %v291 = vsel %vm274, %v19, 0
  %v294 = vsel %vm274, %v20, 0
  %v297 = vsel %vm274, %v21, 0
  %v300 = vsel %vm274, %v22, 0
  %v303 = vsel %vm274, %v23, 0
  %v306 = vsel %vm274, %v24, 0
  %v309 = vsel %vm274, %v25, 0
  %v312 = vsel %vm274, %v26, 0
  %v315 = vsel %vm274, %v27, 0
  %v318 = vsel %vm274, %v28, 0
  %v321 = vsel %vm274, %v29, 0
  %v324 = vsel %vm274, %v30, 0
  %v327 = vsel %vm274, %v31, 0
  %v330 = vsel %vm274, %v32, 0
  %v333 = vsel %vm274, %v33, 0
  %v336 = vsel %vm274, %v34, 0
  %v339 = vsel %vm274, %v35, 0
  %v342 = vsel %vm274, %v36, 0
  %v345 = vsel %vm274, %v37, 0
  %v348 = vsel %vm274, %v38, 0
  %v351 = vsel %vm274, %v39, 0
  %v354 = vsel %vm274, %v40, 0
  %v357 = vsel %vm274, %v41, 0
  %v360 = vsel %vm274, %v42, 0
  %v363 = vsel %vm274, %v43, 0
  %v366 = vsel %vm274, %v44, 0
  %v369 = vsel %vm274, %v45, 0
  %v372 = vsel %vm274, %v46, 0
  %v375 = vsel %vm274, %v47, 0
  %v378 = vsel %vm274, %v48, 0
  %v381 = vsel %vm274, %v49, 0
  %v384 = vsel %vm274, %v50, 0
  %v387 = vsel %vm274, %v51, 0
  %v390 = vsel %vm274, %v52, 0
  %v393 = vsel %vm274, %v53, 0
  %v396 = vsel %vm274, %v54, 0
  %v399 = vsel %vm274, %v55, 0
  %v402 = vsel %vm274, %v56, 0
  %v405 = vsel %vm274, %v57, 0
  %v408 = vsel %vm274, %v58, 0
  %v411 = vsel %vm274, %v59, 0
  %v414 = vsel %vm274, %v60, 0
  %v417 = vsel %vm274, %v61, 0
  %v420 = vsel %vm274, %v62, 0
  %v423 = vsel %vm274, %v63, 0
  %v426 = vsel %vm274, %v64, 0
  %v429 = vsel %vm274, %v65, 0
  %v432 = vsel %vm274, %v66, 0
  %v435 = vsel %vm274, %v67, 0
  %v438 = vsel %vm274, %v68, 0
  %v441 = vsel %vm274, %v69, 0
  %v444 = vsel %vm274, %v70, 0
  %v447 = vsel %vm274, %v71, 0
  %v450 = vsel %vm274, %v72, 0
  %v453 = vsel %vm274, %v73, 0
  %v456 = vsel %vm274, %v74, 0
  %v459 = vsel %vm274, %v75, 0
  %v462 = vsel %vm274, %v76, 0
  %v465 = vsel %vm274, %v77, 0
  %v468 = vsel %vm274, %v78, 0
  %v471 = vsel %vm274, %v79, 0
  %v474 = vsel %vm274, %v80, 0
  %v477 = vsel %vm274, %v81, 0
  %v480 = vsel %vm274, %v82, 0
  %v483 = vsel %vm274, %v83, 0
  %v486 = vsel %vm274, %v84, 0
  %v489 = vsel %vm274, %v85, 0
  %v492 = vsel %vm274, %v86, 0
  %v495 = vsel %vm274, %v87, 0
  %v498 = vsel %vm274, %v88, 0
  %v501 = vsel %vm274, %v89, 0
  %v504 = vsel %vm274, %v90, 0
  %v507 = vsel %vm274, %v91, 0
  %v510 = vsel %vm274, %v92, 0
  %v513 = vsel %vm274, %v93, 0
  %v516 = vsel %vm274, %v94, 0
  %v519 = vsel %vm274, %v95, 0
  %v522 = vsel %vm274, %v96, 0
  %v525 = vsel %vm274, %v97, 0
  %v528 = vsel %vm274, %v98, 0
  %v531 = vsel %vm274, %v99, 0
  %v534 = vsel %vm274, %v100, 0
  %v537 = vsel %vm274, %v101, 0
  %v540 = vsel %vm274, %v102, 0
  %v543 = vsel %vm274, %v103, 0
  %v546 = vsel %vm274, %v104, 0
  %v549 = vsel %vm274, %v105, 0
  %v552 = vsel %vm274, %v106, 0
  %v555 = vsel %vm274, %v107, 0
  %v558 = vsel %vm274, %v108, 0
  %v561 = vsel %vm274, %v109, 0
  %v564 = vsel %vm274, %v110, 0
  %v567 = vsel %vm274, %v111, 0
  %v570 = vsel %vm274, %v112, 0
  %v573 = vsel %vm274, %v113, 0
  %v576 = vsel %vm274, %v114, 0
  %v579 = vsel %vm274, %v115, 0
  %v582 = vsel %vm274, %v116, 0
  %v585 = vsel %vm274, %v117, 0
  %v588 = vsel %vm274, %v118, 0
  %v591 = vsel %vm274, %v119, 0
  %v594 = vsel %vm274, %v120, 0
  %v597 = vsel %vm274, %v121, 0
  %v600 = vsel %vm274, %v122, 0
  %v603 = vsel %vm274, %v123, 0
  %v606 = vsel %vm274, %v124, 0
  %v609 = vsel %vm274, %v125, 0
  %v612 = vsel %vm274, %v126, 0
  %v615 = vsel %vm274, %v127, 0
  %v618 = vsel %vm274, %v128, 0
  %v621 = vsel %vm274, %v129, 0
  %v624 = vsel %vm274, %v130, 0
  %v627 = vsel %vm274, %v131, 0
  %v630 = vsel %vm274, %v132, 0
  %v633 = vsel %vm274, %v133, 0
  %v636 = vsel %vm274, %v134, 0
  %v639 = vsel %vm274, %v135, 0
  %v642 = vsel %vm274, %v136, 0
  %v645 = vsel %vm274, %v137, 0
  %v648 = vsel %vm274, %v138, 0
  %v651 = vsel %vm274, %v139, 0
  %v654 = vsel %vm274, %v140, 0
  %v657 = vsel %vm274, %v141, 0
  %v660 = vsel %vm274, %v142, 0
  %v663 = vsel %vm274, %v143, 0
  %v666 = vsel %vm274, %v144, 0
  %v669 = vsel %vm274, %v145, 0
  %v672 = vsel %vm274, %v146, 0
  %v675 = vsel %vm274, %v147, 0
  %v678 = vsel %vm274, %v148, 0
  %v681 = vsel %vm274, %v149, 0
  %v684 = vsel %vm274, %v150, 0
  %v687 = vsel %vm274, %v151, 0
  %v690 = vsel %vm274, %v152, 0
  %v693 = vsel %vm274, %v153, 0
  %v696 = vsel %vm274, %v154, 0
  %v699 = vsel %vm274, %v155, 0
  %v702 = vsel %vm274, %v156, 0
  %v705 = vsel %vm274, %v157, 0
  %v708 = vsel %vm274, %v158, 0
  %v711 = vsel %vm274, %v159, 0
  %v714 = vsel %vm274, %v160, 0
  %v717 = vsel %vm274, %v161, 0
  %v720 = vsel %vm274, %v162, 0
  %v723 = vsel %vm274, %v163, 0
  %v726 = vsel %vm274, %v164, 0
  %v729 = vsel %vm274, %v165, 0
  %v732 = vsel %vm274, %v166, 0
  %v735 = vsel %vm274, %v167, 0
  %v738 = vsel %vm274, %v168, 0
  %v741 = vsel %vm274, %v169, 0
  %v744 = vsel %vm274, %v170, 0
  %v747 = vsel %vm274, %v171, 0
  %v750 = vsel %vm274, %v172, 0
  %v753 = vsel %vm274, %v173, 0
  %v756 = vsel %vm274, %v174, 0
  %v759 = vsel %vm274, %v175, 0
  %v762 = vsel %vm274, %v176, 0
  %v765 = vsel %vm274, %v177, 0
  %v768 = vsel %vm274, %v178, 0
  %v771 = vsel %vm274, %v179, 0
  %v774 = vsel %vm274, %v180, 0
  %v777 = vsel %vm274, %v181, 0
  %v780 = vsel %vm274, %v182, 0
  %v783 = vsel %vm274, %v183, 0
  %v786 = vsel %vm274, %v184, 0
  %v789 = vsel %vm274, %v185, 0
  %v792 = vsel %vm274, %v186, 0
  %v795 = vsel %vm274, %v187, 0
  %v798 = vsel %vm274, %v188, 0
  %v801 = vsel %vm274, %v189, 0
  %v804 = vsel %vm274, %v190, 0
  %v807 = vsel %vm274, %v191, 0
  %v810 = vsel %vm274, %v192, 0
  %v813 = vsel %vm274, %v193, 0
  %v816 = vsel %vm274, %v194, 0
  %v819 = vsel %vm274, %v195, 0
  %v822 = vsel %vm274, %v196, 0
  %v825 = vsel %vm274, %v197, 0
  %v828 = vsel %vm274, %v198, 0
  %v831 = vsel %vm274, %v199, 0
  %v834 = vsel %vm274, %v200, 0
  %v837 = vsel %vm274, %v201, 0
  %v840 = vsel %vm274, %v202, 0
  %v843 = vsel %vm274, %v203, 0
  %v846 = vsel %vm274, %v204, 0
  %v849 = vsel %vm274, %v205, 0
  %v852 = vsel %vm274, %v206, 0
  %v855 = vsel %vm274, %v207, 0
  %v858 = vsel %vm274, %v208, 0
  %v861 = vsel %vm274, %v209, 0
  %v864 = vsel %vm274, %v210, 0
  %v867 = vsel %vm274, %v211, 0
  %v870 = vsel %vm274, %v212, 0
  %v873 = vsel %vm274, %v213, 0
  %v876 = vsel %vm274, %v214, 0
  %v879 = vsel %vm274, %v215, 0
  %v882 = vsel %vm274, %v216, 0
  %v885 = vsel %vm274, %v217, 0
  %v888 = vsel %vm274, %v218, 0
  %v891 = vsel %vm274, %v219, 0
  %v894 = vsel %vm274, %v220, 0
  %v897 = vsel %vm274, %v221, 0
  %v900 = vsel %vm274, %v222, 0
  %v903 = vsel %vm274, %v223, 0
  %v906 = vsel %vm274, %v224, 0
  %v909 = vsel %vm274, %v225, 0
  %v912 = vsel %vm274, %v226, 0
  %v915 = vsel %vm274, %v227, 0
  %v918 = vsel %vm274, %v228, 0
  %v921 = vsel %vm274, %v229, 0
  %v924 = vsel %vm274, %v230, 0
  %v927 = vsel %vm274, %v231, 0
  %v930 = vsel %vm274, %v232, 0
  %v933 = vsel %vm274, %v233, 0
  %v936 = vsel %vm274, %v234, 0
  %v939 = vsel %vm274, %v235, 0
  %v942 = vsel %vm274, %v236, 0
  %v945 = vsel %vm274, %v237, 0
  %v948 = vsel %vm274, %v238, 0
  %v951 = vsel %vm274, %v239, 0
  %v954 = vsel %vm274, %v240, 0
  %v957 = vsel %vm274, %v241, 0
  %v960 = vsel %vm274, %v242, 0
  %v963 = vsel %vm274, %v243, 0
  %v966 = vsel %vm274, %v244, 0
  %v969 = vsel %vm274, %v245, 0
  %v972 = vsel %vm274, %v246, 0
  %v975 = vsel %vm274, %v247, 0
  %v978 = vsel %vm274, %v248, 0
  %v981 = vsel %vm274, %v249, 0
  %v984 = vsel %vm274, %v250, 0
  %v987 = vsel %vm274, %v251, 0
  %v990 = vsel %vm274, %v252, 0
  %v993 = vsel %vm274, %v253, 0
  %v996 = vsel %vm274, %v254, 0
  %v999 = vsel %vm274, %v255, 0
  %v1002 = vsel %vm274, %v256, 0
  %v1005 = vsel %vm274, %v257, 0
  %v1008 = vsel %vm274, %v258, 0
  %v1011 = vsel %vm274, %v259, 0
  %v1014 = vsel %vm274, %v260, 0
  %v1017 = vsel %vm274, %v261, 0
  %v1020 = vsel %vm274, %v262, 0
  %v1023 = vsel %vm274, %v263, 0
  %v1026 = vsel %vm274, %v264, 0
  %v1029 = vsel %vm274, %v265, 0
  %v1032 = vsel %vm274, %v266, 0
  %v1035 = vsel %vm274, %v267, 0
  %v1038 = vsel %vm274, %v268, 0
  %v1041 = vsel %vm274, %v269, 0
  %1043 = vmatprep.subr.mxu0 0.0
  %1044 = vmatpush1.msra.mxu0 %v270
  %1045 = vmatprep.subr.mxu0 0.0
  %1046 = vmatpush1.msra.mxu0 %v271
  %1047 = vmatprep.subr.mxu0 0.0
  %1048 = vmatpush1.msra.mxu0 %v272
  %1049 = vmatprep.subr.mxu0 0.0
  %1050 = vmatpush1.msra.mxu0 %v273
  %1051 = vmatprep.subr.mxu0 0.0
  %1052 = vmatpush1.msra.mxu0 0.0
  %1053 = vmatprep.subr.mxu0 0.0
  %1054 = vmatpush1.msra.mxu0 0.0
  %1055 = vmatprep.subr.mxu0 0.0
  %1056 = vmatpush1.msra.mxu0 0.0
  %1057 = vmatprep.subr.mxu0 0.0
  %1058 = vmatpush1.msra.mxu0 0.0
  %1059 = vmatprep.subr.mxu0 0.0
  %1060 = vmatpush1.msra.mxu0 0.0
  %1061 = vmatprep.subr.mxu0 0.0
  %1062 = vmatpush1.msra.mxu0 0.0
  %1063 = vmatprep.subr.mxu0 0.0
  %1064 = vmatpush1.msra.mxu0 0.0
  %1065 = vmatprep.subr.mxu0 0.0
  %1066 = vmatpush1.msra.mxu0 0.0
  %1067 = vmatprep.subr.mxu0 0.0
  %1068 = vmatpush1.msra.mxu0 0.0
  %1069 = vmatprep.subr.mxu0 0.0
  %1070 = vmatpush1.msra.mxu0 0.0
  %1071 = vmatprep.subr.mxu0 0.0
  %1072 = vmatpush1.msra.mxu0 0.0
  %1073 = vmatprep.subr.mxu0 0.0
  %1074 = vmatpush1.msra.mxu0 0.0
  %1075 = vmatprep.subr.mxu0 0.0
  %1076 = vmatpush1.msra.mxu0 0.0
  %1077 = vmatprep.subr.mxu0 0.0
  %1078 = vmatpush1.msra.mxu0 0.0
  %1079 = vmatprep.subr.mxu0 0.0
  %1080 = vmatpush1.msra.mxu0 0.0
  %1081 = vmatprep.subr.mxu0 0.0
  %1082 = vmatpush1.msra.mxu0 0.0
  %1083 = vmatprep.subr.mxu0 0.0
  %1084 = vmatpush1.msra.mxu0 0.0
  %1085 = vmatprep.subr.mxu0 0.0
  %1086 = vmatpush1.msra.mxu0 0.0
  %1087 = vmatprep.subr.mxu0 0.0
  %1088 = vmatpush1.msra.mxu0 0.0
  %1089 = vmatprep.subr.mxu0 0.0
  %1090 = vmatpush1.msra.mxu0 0.0
  %1091 = vmatprep.subr.mxu0 0.0
  %1092 = vmatpush1.msra.mxu0 0.0
  %1093 = vmatprep.subr.mxu0 0.0
  %1094 = vmatpush1.msra.mxu0 0.0
  %1095 = vmatprep.subr.mxu0 0.0
  %1096 = vmatpush1.msra.mxu0 0.0
  %1097 = vmatprep.subr.mxu0 0.0
  %1098 = vmatpush1.msra.mxu0 0.0
  %1099 = vmatprep.subr.mxu0 0.0
  %1100 = vmatpush1.msra.mxu0 0.0
  %1101 = vmatprep.subr.mxu0 0.0
  %1102 = vmatpush1.msra.mxu0 0.0
  %1103 = vmatprep.subr.mxu0 0.0
  %1104 = vmatpush1.msra.mxu0 0.0
  %1105 = vmatprep.subr.mxu0 0.0
  %1106 = vmatpush1.msra.mxu0 0.0
  %1107 = vmatprep.mubr.f32.mxu0 0.0
  %1108 = vmatmul.mubr.f32.gmra.mrb[0].mxu0 %v276
  %v1109 = vpop.f32.mrb[0].mxu0
  %v1110 = vadd.f32 0.0, %v1109
  %v1111 = vpop.f32.mrb[0].mxu0
  %1112 = vmatprep.mubr.f32.mxu0 0.0
  %1113 = vmatmul.mubr.f32.gmra.mrb[0].mxu0 %v279
  %v1114 = vpop.f32.mrb[0].mxu0
  %v1115 = vadd.f32 0.0, %v1114
  %v1116 = vpop.f32.mrb[0].mxu0
  %1117 = vmatprep.mubr.f32.mxu0 0.0
  %1118 = vmatmul.mubr.f32.gmra.mrb[0].mxu0 %v282
  %v1119 = vpop.f32.mrb[0].mxu0
  %v1120 = vadd.f32 0.0, %v1119
  %v1121 = vpop.f32.mrb[0].mxu0
  %1122 = vmatprep.mubr.f32.mxu0 0.0
  %1123 = vmatmul.mubr.f32.gmra.mrb[0].mxu0 %v285
  %v1124 = vpop.f32.mrb[0].mxu0
  %v1125 = vadd.f32 0.0, %v1124
  %v1126 = vpop.f32.mrb[0].mxu0
  %1127 = vmatprep.mubr.f32.mxu0 0.0
  %1128 = vmatmul.mubr.f32.gmra.mrb[0].mxu0 %v288
  %v1129 = vpop.f32.mrb[0].mxu0
  %v1130 = vadd.f32 0.0, %v1129
  %v1131 = vpop.f32.mrb[0].mxu0
  %1132 = vmatprep.mubr.f32.mxu0 0.0
  %1133 = vmatmul.mubr.f32.gmra.mrb[0].mxu0 %v291
  %v1134 = vpop.f32.mrb[0].mxu0
  %v1135 = vadd.f32 0.0, %v1134
  %v1136 = vpop.f32.mrb[0].mxu0
  %1137 = vmatprep.mubr.f32.mxu0 0.0
  %1138 = vmatmul.mubr.f32.gmra.mrb[0].mxu0 %v294
  %v1139 = vpop.f32.mrb[0].mxu0
  %v1140 = vadd.f32 0.0, %v1139
  %v1141 = vpop.f32.mrb[0].mxu0
  %1142 = vmatprep.mubr.f32.mxu0 0.0
  %1143 = vmatmul.mubr.f32.gmra.mrb[0].mxu0 %v297
  %v1144 = vpop.f32.mrb[0].mxu0
  %v1145 = vadd.f32 0.0, %v1144
  %v1146 = vpop.f32.mrb[0].mxu0
  %1147 = vmatprep.mubr.f32.mxu0 0.0
  %1148 = vmatmul.mubr.f32.gmra.mrb[0].mxu0 %v300
  %v1149 = vpop.f32.mrb[0].mxu0
  %v1150 = vadd.f32 0.0, %v1149
  %v1151 = vpop.f32.mrb[0].mxu0
  %1152 = vmatprep.mubr.f32.mxu0 0.0
  %1153 = vmatmul.mubr.f32.gmra.mrb[0].mxu0 %v303
  %v1154 = vpop.f32.mrb[0].mxu0
  %v1155 = vadd.f32 0.0, %v1154
  %v1156 = vpop.f32.mrb[0].mxu0
  %1157 = vmatprep.mubr.f32.mxu0 0.0
  %1158 = vmatmul.mubr.f32.gmra.mrb[0].mxu0 %v306
  %v1159 = vpop.f32.mrb[0].mxu0
  %v1160 = vadd.f32 0.0, %v1159
  %v1161 = vpop.f32.mrb[0].mxu0
  %1162 = vmatprep.mubr.f32.mxu0 0.0
  %1163 = vmatmul.mubr.f32.gmra.mrb[0].mxu0 %v309
  %v1164 = vpop.f32.mrb[0].mxu0
  %v1165 = vadd.f32 0.0, %v1164
  %v1166 = vpop.f32.mrb[0].mxu0
  %1167 = vmatprep.mubr.f32.mxu0 0.0
  %1168 = vmatmul.mubr.f32.gmra.mrb[0].mxu0 %v312
  %v1169 = vpop.f32.mrb[0].mxu0
  %v1170 = vadd.f32 0.0, %v1169
  %v1171 = vpop.f32.mrb[0].mxu0
  %1172 = vmatprep.mubr.f32.mxu0 0.0
  %1173 = vmatmul.mubr.f32.gmra.mrb[0].mxu0 %v315
  %v1174 = vpop.f32.mrb[0].mxu0
  %v1175 = vadd.f32 0.0, %v1174
  %v1176 = vpop.f32.mrb[0].mxu0
  %1177 = vmatprep.mubr.f32.mxu0 0.0
  %1178 = vmatmul.mubr.f32.gmra.mrb[0].mxu0 %v318
  %v1179 = vpop.f32.mrb[0].mxu0
  %v1180 = vadd.f32 0.0, %v1179
  %v1181 = vpop.f32.mrb[0].mxu0
  %1182 = vmatprep.mubr.f32.mxu0 0.0
  %1183 = vmatmul.mubr.f32.gmra.mrb[0].mxu0 %v321
  %v1184 = vpop.f32.mrb[0].mxu0
  %v1185 = vadd.f32 0.0, %v1184
  %v1186 = vpop.f32.mrb[0].mxu0
  %1187 = vmatprep.mubr.f32.mxu0 0.0
  %1188 = vmatmul.mubr.f32.gmra.mrb[0].mxu0 %v324
  %v1189 = vpop.f32.mrb[0].mxu0
  %v1190 = vadd.f32 0.0, %v1189
  %v1191 = vpop.f32.mrb[0].mxu0
  %1192 = vmatprep.mubr.f32.mxu0 0.0
  %1193 = vmatmul.mubr.f32.gmra.mrb[0].mxu0 %v327
  %v1194 = vpop.f32.mrb[0].mxu0
  %v1195 = vadd.f32 0.0, %v1194
  %v1196 = vpop.f32.mrb[0].mxu0
  %1197 = vmatprep.mubr.f32.mxu0 0.0
  %1198 = vmatmul.mubr.f32.gmra.mrb[0].mxu0 %v330
  %v1199 = vpop.f32.mrb[0].mxu0
  %v1200 = vadd.f32 0.0, %v1199
  %v1201 = vpop.f32.mrb[0].mxu0
  %1202 = vmatprep.mubr.f32.mxu0 0.0
  %1203 = vmatmul.mubr.f32.gmra.mrb[0].mxu0 %v333
  %v1204 = vpop.f32.mrb[0].mxu0
  %v1205 = vadd.f32 0.0, %v1204
  %v1206 = vpop.f32.mrb[0].mxu0
  %1207 = vmatprep.mubr.f32.mxu0 0.0
  %1208 = vmatmul.mubr.f32.gmra.mrb[0].mxu0 %v336
  %v1209 = vpop.f32.mrb[0].mxu0
  %v1210 = vadd.f32 0.0, %v1209
  %v1211 = vpop.f32.mrb[0].mxu0
  %1212 = vmatprep.mubr.f32.mxu0 0.0
  %1213 = vmatmul.mubr.f32.gmra.mrb[0].mxu0 %v339
  %v1214 = vpop.f32.mrb[0].mxu0
  %v1215 = vadd.f32 0.0, %v1214
  %v1216 = vpop.f32.mrb[0].mxu0
  %1217 = vmatprep.mubr.f32.mxu0 0.0
  %1218 = vmatmul.mubr.f32.gmra.mrb[0].mxu0 %v342
  %v1219 = vpop.f32.mrb[0].mxu0
  %v1220 = vadd.f32 0.0, %v1219
  %v1221 = vpop.f32.mrb[0].mxu0
  %1222 = vmatprep.mubr.f32.mxu0 0.0
  %1223 = vmatmul.mubr.f32.gmra.mrb[0].mxu0 %v345
  %v1224 = vpop.f32.mrb[0].mxu0
  %v1225 = vadd.f32 0.0, %v1224
  %v1226 = vpop.f32.mrb[0].mxu0
  %1227 = vmatprep.mubr.f32.mxu0 0.0
  %1228 = vmatmul.mubr.f32.gmra.mrb[0].mxu0 %v348
  %v1229 = vpop.f32.mrb[0].mxu0
  %v1230 = vadd.f32 0.0, %v1229
  %v1231 = vpop.f32.mrb[0].mxu0
  %1232 = vmatprep.mubr.f32.mxu0 0.0
  %1233 = vmatmul.mubr.f32.gmra.mrb[0].mxu0 %v351
  %v1234 = vpop.f32.mrb[0].mxu0
  %v1235 = vadd.f32 0.0, %v1234
  %v1236 = vpop.f32.mrb[0].mxu0
  %1237 = vmatprep.mubr.f32.mxu0 0.0
  %1238 = vmatmul.mubr.f32.gmra.mrb[0].mxu0 %v354
  %v1239 = vpop.f32.mrb[0].mxu0
  %v1240 = vadd.f32 0.0, %v1239
  %v1241 = vpop.f32.mrb[0].mxu0
  %1242 = vmatprep.mubr.f32.mxu0 0.0
  %1243 = vmatmul.mubr.f32.gmra.mrb[0].mxu0 %v357
  %v1244 = vpop.f32.mrb[0].mxu0
  %v1245 = vadd.f32 0.0, %v1244
  %v1246 = vpop.f32.mrb[0].mxu0
  %1247 = vmatprep.mubr.f32.mxu0 0.0
  %1248 = vmatmul.mubr.f32.gmra.mrb[0].mxu0 %v360
  %v1249 = vpop.f32.mrb[0].mxu0
  %v1250 = vadd.f32 0.0, %v1249
  %v1251 = vpop.f32.mrb[0].mxu0
  %1252 = vmatprep.mubr.f32.mxu0 0.0
  %1253 = vmatmul.mubr.f32.gmra.mrb[0].mxu0 %v363
  %v1254 = vpop.f32.mrb[0].mxu0
  %v1255 = vadd.f32 0.0, %v1254
  %v1256 = vpop.f32.mrb[0].mxu0
  %1257 = vmatprep.mubr.f32.mxu0 0.0
  %1258 = vmatmul.mubr.f32.gmra.mrb[0].mxu0 %v366
  %v1259 = vpop.f32.mrb[0].mxu0
  %v1260 = vadd.f32 0.0, %v1259
  %v1261 = vpop.f32.mrb[0].mxu0
  %1262 = vmatprep.mubr.f32.mxu0 0.0
  %1263 = vmatmul.mubr.f32.gmra.mrb[0].mxu0 %v369
  %v1264 = vpop.f32.mrb[0].mxu0
  %v1265 = vadd.f32 0.0, %v1264
  %v1266 = vpop.f32.mrb[0].mxu0
  %1267 = vmatprep.mubr.f32.mxu0 0.0
  %1268 = vmatmul.mubr.f32.gmra.mrb[0].mxu0 %v372
  %v1269 = vpop.f32.mrb[0].mxu0
  %v1270 = vadd.f32 0.0, %v1269
  %v1271 = vpop.f32.mrb[0].mxu0
  %1272 = vmatprep.mubr.f32.mxu0 0.0
  %1273 = vmatmul.mubr.f32.gmra.mrb[0].mxu0 %v375
  %v1274 = vpop.f32.mrb[0].mxu0
  %v1275 = vadd.f32 0.0, %v1274
  %v1276 = vpop.f32.mrb[0].mxu0
  %1277 = vmatprep.mubr.f32.mxu0 0.0
  %1278 = vmatmul.mubr.f32.gmra.mrb[0].mxu0 %v378
  %v1279 = vpop.f32.mrb[0].mxu0
  %v1280 = vadd.f32 0.0, %v1279
  %v1281 = vpop.f32.mrb[0].mxu0
  %1282 = vmatprep.mubr.f32.mxu0 0.0
  %1283 = vmatmul.mubr.f32.gmra.mrb[0].mxu0 %v381
  %v1284 = vpop.f32.mrb[0].mxu0
  %v1285 = vadd.f32 0.0, %v1284
  %v1286 = vpop.f32.mrb[0].mxu0
  %1287 = vmatprep.mubr.f32.mxu0 0.0
  %1288 = vmatmul.mubr.f32.gmra.mrb[0].mxu0 %v384
  %v1289 = vpop.f32.mrb[0].mxu0
  %v1290 = vadd.f32 0.0, %v1289
  %v1291 = vpop.f32.mrb[0].mxu0
  %1292 = vmatprep.mubr.f32.mxu0 0.0
  %1293 = vmatmul.mubr.f32.gmra.mrb[0].mxu0 %v387
  %v1294 = vpop.f32.mrb[0].mxu0
  %v1295 = vadd.f32 0.0, %v1294
  %v1296 = vpop.f32.mrb[0].mxu0
  %1297 = vmatprep.mubr.f32.mxu0 0.0
  %1298 = vmatmul.mubr.f32.gmra.mrb[0].mxu0 %v390
  %v1299 = vpop.f32.mrb[0].mxu0
  %v1300 = vadd.f32 0.0, %v1299
  %v1301 = vpop.f32.mrb[0].mxu0
  %1302 = vmatprep.mubr.f32.mxu0 0.0
  %1303 = vmatmul.mubr.f32.gmra.mrb[0].mxu0 %v393
  %v1304 = vpop.f32.mrb[0].mxu0
  %v1305 = vadd.f32 0.0, %v1304
  %v1306 = vpop.f32.mrb[0].mxu0
  %1307 = vmatprep.mubr.f32.mxu0 0.0
  %1308 = vmatmul.mubr.f32.gmra.mrb[0].mxu0 %v396
  %v1309 = vpop.f32.mrb[0].mxu0
  %v1310 = vadd.f32 0.0, %v1309
  %v1311 = vpop.f32.mrb[0].mxu0
  %1312 = vmatprep.mubr.f32.mxu0 0.0
  %1313 = vmatmul.mubr.f32.gmra.mrb[0].mxu0 %v399
  %v1314 = vpop.f32.mrb[0].mxu0
  %v1315 = vadd.f32 0.0, %v1314
  %v1316 = vpop.f32.mrb[0].mxu0
  %1317 = vmatprep.mubr.f32.mxu0 0.0
  %1318 = vmatmul.mubr.f32.gmra.mrb[0].mxu0 %v402
  %v1319 = vpop.f32.mrb[0].mxu0
  %v1320 = vadd.f32 0.0, %v1319
  %v1321 = vpop.f32.mrb[0].mxu0
  %1322 = vmatprep.mubr.f32.mxu0 0.0
  %1323 = vmatmul.mubr.f32.gmra.mrb[0].mxu0 %v405
  %v1324 = vpop.f32.mrb[0].mxu0
  %v1325 = vadd.f32 0.0, %v1324
  %v1326 = vpop.f32.mrb[0].mxu0
  %1327 = vmatprep.mubr.f32.mxu0 0.0
  %1328 = vmatmul.mubr.f32.gmra.mrb[0].mxu0 %v408
  %v1329 = vpop.f32.mrb[0].mxu0
  %v1330 = vadd.f32 0.0, %v1329
  %v1331 = vpop.f32.mrb[0].mxu0
  %1332 = vmatprep.mubr.f32.mxu0 0.0
  %1333 = vmatmul.mubr.f32.gmra.mrb[0].mxu0 %v411
  %v1334 = vpop.f32.mrb[0].mxu0
  %v1335 = vadd.f32 0.0, %v1334
  %v1336 = vpop.f32.mrb[0].mxu0
  %1337 = vmatprep.mubr.f32.mxu0 0.0
  %1338 = vmatmul.mubr.f32.gmra.mrb[0].mxu0 %v414
  %v1339 = vpop.f32.mrb[0].mxu0
  %v1340 = vadd.f32 0.0, %v1339
  %v1341 = vpop.f32.mrb[0].mxu0
  %1342 = vmatprep.mubr.f32.mxu0 0.0
  %1343 = vmatmul.mubr.f32.gmra.mrb[0].mxu0 %v417
  %v1344 = vpop.f32.mrb[0].mxu0
  %v1345 = vadd.f32 0.0, %v1344
  %v1346 = vpop.f32.mrb[0].mxu0
  %1347 = vmatprep.mubr.f32.mxu0 0.0
  %1348 = vmatmul.mubr.f32.gmra.mrb[0].mxu0 %v420
  %v1349 = vpop.f32.mrb[0].mxu0
  %v1350 = vadd.f32 0.0, %v1349
  %v1351 = vpop.f32.mrb[0].mxu0
  %1352 = vmatprep.mubr.f32.mxu0 0.0
  %1353 = vmatmul.mubr.f32.gmra.mrb[0].mxu0 %v423
  %v1354 = vpop.f32.mrb[0].mxu0
  %v1355 = vadd.f32 0.0, %v1354
  %v1356 = vpop.f32.mrb[0].mxu0
  %1357 = vmatprep.mubr.f32.mxu0 0.0
  %1358 = vmatmul.mubr.f32.gmra.mrb[0].mxu0 %v426
  %v1359 = vpop.f32.mrb[0].mxu0
  %v1360 = vadd.f32 0.0, %v1359
  %v1361 = vpop.f32.mrb[0].mxu0
  %1362 = vmatprep.mubr.f32.mxu0 0.0
  %1363 = vmatmul.mubr.f32.gmra.mrb[0].mxu0 %v429
  %v1364 = vpop.f32.mrb[0].mxu0
  %v1365 = vadd.f32 0.0, %v1364
  %v1366 = vpop.f32.mrb[0].mxu0
  %1367 = vmatprep.mubr.f32.mxu0 0.0
  %1368 = vmatmul.mubr.f32.gmra.mrb[0].mxu0 %v432
  %v1369 = vpop.f32.mrb[0].mxu0
  %v1370 = vadd.f32 0.0, %v1369
  %v1371 = vpop.f32.mrb[0].mxu0
  %1372 = vmatprep.mubr.f32.mxu0 0.0
  %1373 = vmatmul.mubr.f32.gmra.mrb[0].mxu0 %v435
  %v1374 = vpop.f32.mrb[0].mxu0
  %v1375 = vadd.f32 0.0, %v1374
  %v1376 = vpop.f32.mrb[0].mxu0
  %1377 = vmatprep.mubr.f32.mxu0 0.0
  %1378 = vmatmul.mubr.f32.gmra.mrb[0].mxu0 %v438
  %v1379 = vpop.f32.mrb[0].mxu0
  %v1380 = vadd.f32 0.0, %v1379
  %v1381 = vpop.f32.mrb[0].mxu0
  %1382 = vmatprep.mubr.f32.mxu0 0.0
  %1383 = vmatmul.mubr.f32.gmra.mrb[0].mxu0 %v441
  %v1384 = vpop.f32.mrb[0].mxu0
  %v1385 = vadd.f32 0.0, %v1384
  %v1386 = vpop.f32.mrb[0].mxu0
  %1387 = vmatprep.mubr.f32.mxu0 0.0
  %1388 = vmatmul.mubr.f32.gmra.mrb[0].mxu0 %v444
  %v1389 = vpop.f32.mrb[0].mxu0
  %v1390 = vadd.f32 0.0, %v1389
  %v1391 = vpop.f32.mrb[0].mxu0
  %1392 = vmatprep.mubr.f32.mxu0 0.0
  %1393 = vmatmul.mubr.f32.gmra.mrb[0].mxu0 %v447
  %v1394 = vpop.f32.mrb[0].mxu0
  %v1395 = vadd.f32 0.0, %v1394
  %v1396 = vpop.f32.mrb[0].mxu0
  %1397 = vmatprep.mubr.f32.mxu0 0.0
  %1398 = vmatmul.mubr.f32.gmra.mrb[0].mxu0 %v450
  %v1399 = vpop.f32.mrb[0].mxu0
  %v1400 = vadd.f32 0.0, %v1399
  %v1401 = vpop.f32.mrb[0].mxu0
  %1402 = vmatprep.mubr.f32.mxu0 0.0
  %1403 = vmatmul.mubr.f32.gmra.mrb[0].mxu0 %v453
  %v1404 = vpop.f32.mrb[0].mxu0
  %v1405 = vadd.f32 0.0, %v1404
  %v1406 = vpop.f32.mrb[0].mxu0
  %1407 = vmatprep.mubr.f32.mxu0 0.0
  %1408 = vmatmul.mubr.f32.gmra.mrb[0].mxu0 %v456
  %v1409 = vpop.f32.mrb[0].mxu0
  %v1410 = vadd.f32 0.0, %v1409
  %v1411 = vpop.f32.mrb[0].mxu0
  %1412 = vmatprep.mubr.f32.mxu0 0.0
  %1413 = vmatmul.mubr.f32.gmra.mrb[0].mxu0 %v459
  %v1414 = vpop.f32.mrb[0].mxu0
  %v1415 = vadd.f32 0.0, %v1414
  %v1416 = vpop.f32.mrb[0].mxu0
  %1417 = vmatprep.mubr.f32.mxu0 0.0
  %1418 = vmatmul.mubr.f32.gmra.mrb[0].mxu0 %v462
  %v1419 = vpop.f32.mrb[0].mxu0
  %v1420 = vadd.f32 0.0, %v1419
  %v1421 = vpop.f32.mrb[0].mxu0
  %1422 = vmatprep.mubr.f32.mxu0 0.0
  %1423 = vmatmul.mubr.f32.gmra.mrb[0].mxu0 %v465
  %v1424 = vpop.f32.mrb[0].mxu0
  %v1425 = vadd.f32 0.0, %v1424
  %v1426 = vpop.f32.mrb[0].mxu0
  %1427 = vmatprep.mubr.f32.mxu0 0.0
  %1428 = vmatmul.mubr.f32.gmra.mrb[0].mxu0 %v468
  %v1429 = vpop.f32.mrb[0].mxu0
  %v1430 = vadd.f32 0.0, %v1429
  %v1431 = vpop.f32.mrb[0].mxu0
  %1432 = vmatprep.mubr.f32.mxu0 0.0
  %1433 = vmatmul.mubr.f32.gmra.mrb[0].mxu0 %v471
  %v1434 = vpop.f32.mrb[0].mxu0
  %v1435 = vadd.f32 0.0, %v1434
  %v1436 = vpop.f32.mrb[0].mxu0
  %1437 = vmatprep.mubr.f32.mxu0 0.0
  %1438 = vmatmul.mubr.f32.gmra.mrb[0].mxu0 %v474
  %v1439 = vpop.f32.mrb[0].mxu0
  %v1440 = vadd.f32 0.0, %v1439
  %v1441 = vpop.f32.mrb[0].mxu0
  %1442 = vmatprep.mubr.f32.mxu0 0.0
  %1443 = vmatmul.mubr.f32.gmra.mrb[0].mxu0 %v477
  %v1444 = vpop.f32.mrb[0].mxu0
  %v1445 = vadd.f32 0.0, %v1444
  %v1446 = vpop.f32.mrb[0].mxu0
  %1447 = vmatprep.mubr.f32.mxu0 0.0
  %1448 = vmatmul.mubr.f32.gmra.mrb[0].mxu0 %v480
  %v1449 = vpop.f32.mrb[0].mxu0
  %v1450 = vadd.f32 0.0, %v1449
  %v1451 = vpop.f32.mrb[0].mxu0
  %1452 = vmatprep.mubr.f32.mxu0 0.0
  %1453 = vmatmul.mubr.f32.gmra.mrb[0].mxu0 %v483
  %v1454 = vpop.f32.mrb[0].mxu0
  %v1455 = vadd.f32 0.0, %v1454
  %v1456 = vpop.f32.mrb[0].mxu0
  %1457 = vmatprep.mubr.f32.mxu0 0.0
  %1458 = vmatmul.mubr.f32.gmra.mrb[0].mxu0 %v486
  %v1459 = vpop.f32.mrb[0].mxu0
  %v1460 = vadd.f32 0.0, %v1459
  %v1461 = vpop.f32.mrb[0].mxu0
  %1462 = vmatprep.mubr.f32.mxu0 0.0
  %1463 = vmatmul.mubr.f32.gmra.mrb[0].mxu0 %v489
  %v1464 = vpop.f32.mrb[0].mxu0
  %v1465 = vadd.f32 0.0, %v1464
  %v1466 = vpop.f32.mrb[0].mxu0
  %1467 = vmatprep.mubr.f32.mxu0 0.0
  %1468 = vmatmul.mubr.f32.gmra.mrb[0].mxu0 %v492
  %v1469 = vpop.f32.mrb[0].mxu0
  %v1470 = vadd.f32 0.0, %v1469
  %v1471 = vpop.f32.mrb[0].mxu0
  %1472 = vmatprep.mubr.f32.mxu0 0.0
  %1473 = vmatmul.mubr.f32.gmra.mrb[0].mxu0 %v495
  %v1474 = vpop.f32.mrb[0].mxu0
  %v1475 = vadd.f32 0.0, %v1474
  %v1476 = vpop.f32.mrb[0].mxu0
  %1477 = vmatprep.mubr.f32.mxu0 0.0
  %1478 = vmatmul.mubr.f32.gmra.mrb[0].mxu0 %v498
  %v1479 = vpop.f32.mrb[0].mxu0
  %v1480 = vadd.f32 0.0, %v1479
  %v1481 = vpop.f32.mrb[0].mxu0
  %1482 = vmatprep.mubr.f32.mxu0 0.0
  %1483 = vmatmul.mubr.f32.gmra.mrb[0].mxu0 %v501
  %v1484 = vpop.f32.mrb[0].mxu0
  %v1485 = vadd.f32 0.0, %v1484
  %v1486 = vpop.f32.mrb[0].mxu0
  %1487 = vmatprep.mubr.f32.mxu0 0.0
  %1488 = vmatmul.mubr.f32.gmra.mrb[0].mxu0 %v504
  %v1489 = vpop.f32.mrb[0].mxu0
  %v1490 = vadd.f32 0.0, %v1489
  %v1491 = vpop.f32.mrb[0].mxu0
  %1492 = vmatprep.mubr.f32.mxu0 0.0
  %1493 = vmatmul.mubr.f32.gmra.mrb[0].mxu0 %v507
  %v1494 = vpop.f32.mrb[0].mxu0
  %v1495 = vadd.f32 0.0, %v1494
  %v1496 = vpop.f32.mrb[0].mxu0
  %1497 = vmatprep.mubr.f32.mxu0 0.0
  %1498 = vmatmul.mubr.f32.gmra.mrb[0].mxu0 %v510
  %v1499 = vpop.f32.mrb[0].mxu0
  %v1500 = vadd.f32 0.0, %v1499
  %v1501 = vpop.f32.mrb[0].mxu0
  %1502 = vmatprep.mubr.f32.mxu0 0.0
  %1503 = vmatmul.mubr.f32.gmra.mrb[0].mxu0 %v513
  %v1504 = vpop.f32.mrb[0].mxu0
  %v1505 = vadd.f32 0.0, %v1504
  %v1506 = vpop.f32.mrb[0].mxu0
  %1507 = vmatprep.mubr.f32.mxu0 0.0
  %1508 = vmatmul.mubr.f32.gmra.mrb[0].mxu0 %v516
  %v1509 = vpop.f32.mrb[0].mxu0
  %v1510 = vadd.f32 0.0, %v1509
  %v1511 = vpop.f32.mrb[0].mxu0
  %1512 = vmatprep.mubr.f32.mxu0 0.0
  %1513 = vmatmul.mubr.f32.gmra.mrb[0].mxu0 %v519
  %v1514 = vpop.f32.mrb[0].mxu0
  %v1515 = vadd.f32 0.0, %v1514
  %v1516 = vpop.f32.mrb[0].mxu0
  %1517 = vmatprep.mubr.f32.mxu0 0.0
  %1518 = vmatmul.mubr.f32.gmra.mrb[0].mxu0 %v522
  %v1519 = vpop.f32.mrb[0].mxu0
  %v1520 = vadd.f32 0.0, %v1519
  %v1521 = vpop.f32.mrb[0].mxu0
  %1522 = vmatprep.mubr.f32.mxu0 0.0
  %1523 = vmatmul.mubr.f32.gmra.mrb[0].mxu0 %v525
  %v1524 = vpop.f32.mrb[0].mxu0
  %v1525 = vadd.f32 0.0, %v1524
  %v1526 = vpop.f32.mrb[0].mxu0
  %1527 = vmatprep.mubr.f32.mxu0 0.0
  %1528 = vmatmul.mubr.f32.gmra.mrb[0].mxu0 %v528
  %v1529 = vpop.f32.mrb[0].mxu0
  %v1530 = vadd.f32 0.0, %v1529
  %v1531 = vpop.f32.mrb[0].mxu0
  %1532 = vmatprep.mubr.f32.mxu0 0.0
  %1533 = vmatmul.mubr.f32.gmra.mrb[0].mxu0 %v531
  %v1534 = vpop.f32.mrb[0].mxu0
  %v1535 = vadd.f32 0.0, %v1534
  %v1536 = vpop.f32.mrb[0].mxu0
  %1537 = vmatprep.mubr.f32.mxu0 0.0
  %1538 = vmatmul.mubr.f32.gmra.mrb[0].mxu0 %v534
  %v1539 = vpop.f32.mrb[0].mxu0
  %v1540 = vadd.f32 0.0, %v1539
  %v1541 = vpop.f32.mrb[0].mxu0
  %1542 = vmatprep.mubr.f32.mxu0 0.0
  %1543 = vmatmul.mubr.f32.gmra.mrb[0].mxu0 %v537
  %v1544 = vpop.f32.mrb[0].mxu0
  %v1545 = vadd.f32 0.0, %v1544
  %v1546 = vpop.f32.mrb[0].mxu0
  %1547 = vmatprep.mubr.f32.mxu0 0.0
  %1548 = vmatmul.mubr.f32.gmra.mrb[0].mxu0 %v540
  %v1549 = vpop.f32.mrb[0].mxu0
  %v1550 = vadd.f32 0.0, %v1549
  %v1551 = vpop.f32.mrb[0].mxu0
  %1552 = vmatprep.mubr.f32.mxu0 0.0
  %1553 = vmatmul.mubr.f32.gmra.mrb[0].mxu0 %v543
  %v1554 = vpop.f32.mrb[0].mxu0
  %v1555 = vadd.f32 0.0, %v1554
  %v1556 = vpop.f32.mrb[0].mxu0
  %1557 = vmatprep.mubr.f32.mxu0 0.0
  %1558 = vmatmul.mubr.f32.gmra.mrb[0].mxu0 %v546
  %v1559 = vpop.f32.mrb[0].mxu0
  %v1560 = vadd.f32 0.0, %v1559
  %v1561 = vpop.f32.mrb[0].mxu0
  %1562 = vmatprep.mubr.f32.mxu0 0.0
  %1563 = vmatmul.mubr.f32.gmra.mrb[0].mxu0 %v549
  %v1564 = vpop.f32.mrb[0].mxu0
  %v1565 = vadd.f32 0.0, %v1564
  %v1566 = vpop.f32.mrb[0].mxu0
  %1567 = vmatprep.mubr.f32.mxu0 0.0
  %1568 = vmatmul.mubr.f32.gmra.mrb[0].mxu0 %v552
  %v1569 = vpop.f32.mrb[0].mxu0
  %v1570 = vadd.f32 0.0, %v1569
  %v1571 = vpop.f32.mrb[0].mxu0
  %1572 = vmatprep.mubr.f32.mxu0 0.0
  %1573 = vmatmul.mubr.f32.gmra.mrb[0].mxu0 %v555
  %v1574 = vpop.f32.mrb[0].mxu0
  %v1575 = vadd.f32 0.0, %v1574
  %v1576 = vpop.f32.mrb[0].mxu0
  %1577 = vmatprep.mubr.f32.mxu0 0.0
  %1578 = vmatmul.mubr.f32.gmra.mrb[0].mxu0 %v558
  %v1579 = vpop.f32.mrb[0].mxu0
  %v1580 = vadd.f32 0.0, %v1579
  %v1581 = vpop.f32.mrb[0].mxu0
  %1582 = vmatprep.mubr.f32.mxu0 0.0
  %1583 = vmatmul.mubr.f32.gmra.mrb[0].mxu0 %v561
  %v1584 = vpop.f32.mrb[0].mxu0
  %v1585 = vadd.f32 0.0, %v1584
  %v1586 = vpop.f32.mrb[0].mxu0
  %1587 = vmatprep.mubr.f32.mxu0 0.0
  %1588 = vmatmul.mubr.f32.gmra.mrb[0].mxu0 %v564
  %v1589 = vpop.f32.mrb[0].mxu0
  %v1590 = vadd.f32 0.0, %v1589
  %v1591 = vpop.f32.mrb[0].mxu0
  %1592 = vmatprep.mubr.f32.mxu0 0.0
  %1593 = vmatmul.mubr.f32.gmra.mrb[0].mxu0 %v567
  %v1594 = vpop.f32.mrb[0].mxu0
  %v1595 = vadd.f32 0.0, %v1594
  %v1596 = vpop.f32.mrb[0].mxu0
  %1597 = vmatprep.mubr.f32.mxu0 0.0
  %1598 = vmatmul.mubr.f32.gmra.mrb[0].mxu0 %v570
  %v1599 = vpop.f32.mrb[0].mxu0
  %v1600 = vadd.f32 0.0, %v1599
  %v1601 = vpop.f32.mrb[0].mxu0
  %1602 = vmatprep.mubr.f32.mxu0 0.0
  %1603 = vmatmul.mubr.f32.gmra.mrb[0].mxu0 %v573
  %v1604 = vpop.f32.mrb[0].mxu0
  %v1605 = vadd.f32 0.0, %v1604
  %v1606 = vpop.f32.mrb[0].mxu0
  %1607 = vmatprep.mubr.f32.mxu0 0.0
  %1608 = vmatmul.mubr.f32.gmra.mrb[0].mxu0 %v576
  %v1609 = vpop.f32.mrb[0].mxu0
  %v1610 = vadd.f32 0.0, %v1609
  %v1611 = vpop.f32.mrb[0].mxu0
  %1612 = vmatprep.mubr.f32.mxu0 0.0
  %1613 = vmatmul.mubr.f32.gmra.mrb[0].mxu0 %v579
  %v1614 = vpop.f32.mrb[0].mxu0
  %v1615 = vadd.f32 0.0, %v1614
  %v1616 = vpop.f32.mrb[0].mxu0
  %1617 = vmatprep.mubr.f32.mxu0 0.0
  %1618 = vmatmul.mubr.f32.gmra.mrb[0].mxu0 %v582
  %v1619 = vpop.f32.mrb[0].mxu0
  %v1620 = vadd.f32 0.0, %v1619
  %v1621 = vpop.f32.mrb[0].mxu0
  %1622 = vmatprep.mubr.f32.mxu0 0.0
  %1623 = vmatmul.mubr.f32.gmra.mrb[0].mxu0 %v585
  %v1624 = vpop.f32.mrb[0].mxu0
  %v1625 = vadd.f32 0.0, %v1624
  %v1626 = vpop.f32.mrb[0].mxu0
  %1627 = vmatprep.mubr.f32.mxu0 0.0
  %1628 = vmatmul.mubr.f32.gmra.mrb[0].mxu0 %v588
  %v1629 = vpop.f32.mrb[0].mxu0
  %v1630 = vadd.f32 0.0, %v1629
  %v1631 = vpop.f32.mrb[0].mxu0
  %1632 = vmatprep.mubr.f32.mxu0 0.0
  %1633 = vmatmul.mubr.f32.gmra.mrb[0].mxu0 %v591
  %v1634 = vpop.f32.mrb[0].mxu0
  %v1635 = vadd.f32 0.0, %v1634
  %v1636 = vpop.f32.mrb[0].mxu0
  %1637 = vmatprep.mubr.f32.mxu0 0.0
  %1638 = vmatmul.mubr.f32.gmra.mrb[0].mxu0 %v594
  %v1639 = vpop.f32.mrb[0].mxu0
  %v1640 = vadd.f32 0.0, %v1639
  %v1641 = vpop.f32.mrb[0].mxu0
  %1642 = vmatprep.mubr.f32.mxu0 0.0
  %1643 = vmatmul.mubr.f32.gmra.mrb[0].mxu0 %v597
  %v1644 = vpop.f32.mrb[0].mxu0
  %v1645 = vadd.f32 0.0, %v1644
  %v1646 = vpop.f32.mrb[0].mxu0
  %1647 = vmatprep.mubr.f32.mxu0 0.0
  %1648 = vmatmul.mubr.f32.gmra.mrb[0].mxu0 %v600
  %v1649 = vpop.f32.mrb[0].mxu0
  %v1650 = vadd.f32 0.0, %v1649
  %v1651 = vpop.f32.mrb[0].mxu0
  %1652 = vmatprep.mubr.f32.mxu0 0.0
  %1653 = vmatmul.mubr.f32.gmra.mrb[0].mxu0 %v603
  %v1654 = vpop.f32.mrb[0].mxu0
  %v1655 = vadd.f32 0.0, %v1654
  %v1656 = vpop.f32.mrb[0].mxu0
  %1657 = vmatprep.mubr.f32.mxu0 0.0
  %1658 = vmatmul.mubr.f32.gmra.mrb[0].mxu0 %v606
  %v1659 = vpop.f32.mrb[0].mxu0
  %v1660 = vadd.f32 0.0, %v1659
  %v1661 = vpop.f32.mrb[0].mxu0
  %1662 = vmatprep.mubr.f32.mxu0 0.0
  %1663 = vmatmul.mubr.f32.gmra.mrb[0].mxu0 %v609
  %v1664 = vpop.f32.mrb[0].mxu0
  %v1665 = vadd.f32 0.0, %v1664
  %v1666 = vpop.f32.mrb[0].mxu0
  %1667 = vmatprep.mubr.f32.mxu0 0.0
  %1668 = vmatmul.mubr.f32.gmra.mrb[0].mxu0 %v612
  %v1669 = vpop.f32.mrb[0].mxu0
  %v1670 = vadd.f32 0.0, %v1669
  %v1671 = vpop.f32.mrb[0].mxu0
  %1672 = vmatprep.mubr.f32.mxu0 0.0
  %1673 = vmatmul.mubr.f32.gmra.mrb[0].mxu0 %v615
  %v1674 = vpop.f32.mrb[0].mxu0
  %v1675 = vadd.f32 0.0, %v1674
  %v1676 = vpop.f32.mrb[0].mxu0
  %1677 = vmatprep.mubr.f32.mxu0 0.0
  %1678 = vmatmul.mubr.f32.gmra.mrb[0].mxu0 %v618
  %v1679 = vpop.f32.mrb[0].mxu0
  %v1680 = vadd.f32 0.0, %v1679
  %v1681 = vpop.f32.mrb[0].mxu0
  %1682 = vmatprep.mubr.f32.mxu0 0.0
  %1683 = vmatmul.mubr.f32.gmra.mrb[0].mxu0 %v621
  %v1684 = vpop.f32.mrb[0].mxu0
  %v1685 = vadd.f32 0.0, %v1684
  %v1686 = vpop.f32.mrb[0].mxu0
  %1687 = vmatprep.mubr.f32.mxu0 0.0
  %1688 = vmatmul.mubr.f32.gmra.mrb[0].mxu0 %v624
  %v1689 = vpop.f32.mrb[0].mxu0
  %v1690 = vadd.f32 0.0, %v1689
  %v1691 = vpop.f32.mrb[0].mxu0
  %1692 = vmatprep.mubr.f32.mxu0 0.0
  %1693 = vmatmul.mubr.f32.gmra.mrb[0].mxu0 %v627
  %v1694 = vpop.f32.mrb[0].mxu0
  %v1695 = vadd.f32 0.0, %v1694
  %v1696 = vpop.f32.mrb[0].mxu0
  %1697 = vmatprep.mubr.f32.mxu0 0.0
  %1698 = vmatmul.mubr.f32.gmra.mrb[0].mxu0 %v630
  %v1699 = vpop.f32.mrb[0].mxu0
  %v1700 = vadd.f32 0.0, %v1699
  %v1701 = vpop.f32.mrb[0].mxu0
  %1702 = vmatprep.mubr.f32.mxu0 0.0
  %1703 = vmatmul.mubr.f32.gmra.mrb[0].mxu0 %v633
  %v1704 = vpop.f32.mrb[0].mxu0
  %v1705 = vadd.f32 0.0, %v1704
  %v1706 = vpop.f32.mrb[0].mxu0
  %1707 = vmatprep.mubr.f32.mxu0 0.0
  %1708 = vmatmul.mubr.f32.gmra.mrb[0].mxu0 %v636
  %v1709 = vpop.f32.mrb[0].mxu0
  %v1710 = vadd.f32 0.0, %v1709
  %v1711 = vpop.f32.mrb[0].mxu0
  %1712 = vmatprep.mubr.f32.mxu0 0.0
  %1713 = vmatmul.mubr.f32.gmra.mrb[0].mxu0 %v639
  %v1714 = vpop.f32.mrb[0].mxu0
  %v1715 = vadd.f32 0.0, %v1714
  %v1716 = vpop.f32.mrb[0].mxu0
  %1717 = vmatprep.mubr.f32.mxu0 0.0
  %1718 = vmatmul.mubr.f32.gmra.mrb[0].mxu0 %v642
  %v1719 = vpop.f32.mrb[0].mxu0
  %v1720 = vadd.f32 0.0, %v1719
  %v1721 = vpop.f32.mrb[0].mxu0
  %1722 = vmatprep.mubr.f32.mxu0 0.0
  %1723 = vmatmul.mubr.f32.gmra.mrb[0].mxu0 %v645
  %v1724 = vpop.f32.mrb[0].mxu0
  %v1725 = vadd.f32 0.0, %v1724
  %v1726 = vpop.f32.mrb[0].mxu0
  %1727 = vmatprep.mubr.f32.mxu0 0.0
  %1728 = vmatmul.mubr.f32.gmra.mrb[0].mxu0 %v648
  %v1729 = vpop.f32.mrb[0].mxu0
  %v1730 = vadd.f32 0.0, %v1729
  %v1731 = vpop.f32.mrb[0].mxu0
  %1732 = vmatprep.mubr.f32.mxu0 0.0
  %1733 = vmatmul.mubr.f32.gmra.mrb[0].mxu0 %v651
  %v1734 = vpop.f32.mrb[0].mxu0
  %v1735 = vadd.f32 0.0, %v1734
  %v1736 = vpop.f32.mrb[0].mxu0
  %1737 = vmatprep.mubr.f32.mxu0 0.0
  %1738 = vmatmul.mubr.f32.gmra.mrb[0].mxu0 %v654
  %v1739 = vpop.f32.mrb[0].mxu0
  %v1740 = vadd.f32 0.0, %v1739
  %v1741 = vpop.f32.mrb[0].mxu0
  %1742 = vmatprep.mubr.f32.mxu0 0.0
  %1743 = vmatmul.mubr.f32.gmra.mrb[0].mxu0 %v657
  %v1744 = vpop.f32.mrb[0].mxu0
  %v1745 = vadd.f32 0.0, %v1744
  %v1746 = vpop.f32.mrb[0].mxu0
  %1747 = vmatprep.mubr.f32.mxu0 0.0
  %1748 = vmatmul.mubr.f32.gmra.mrb[0].mxu0 %v660
  %v1749 = vpop.f32.mrb[0].mxu0
  %v1750 = vadd.f32 0.0, %v1749
  %v1751 = vpop.f32.mrb[0].mxu0
  %1752 = vmatprep.mubr.f32.mxu0 0.0
  %1753 = vmatmul.mubr.f32.gmra.mrb[0].mxu0 %v663
  %v1754 = vpop.f32.mrb[0].mxu0
  %v1755 = vadd.f32 0.0, %v1754
  %v1756 = vpop.f32.mrb[0].mxu0
  %1757 = vmatprep.mubr.f32.mxu0 0.0
  %1758 = vmatmul.mubr.f32.gmra.mrb[0].mxu0 %v666
  %v1759 = vpop.f32.mrb[0].mxu0
  %v1760 = vadd.f32 0.0, %v1759
  %v1761 = vpop.f32.mrb[0].mxu0
  %1762 = vmatprep.mubr.f32.mxu0 0.0
  %1763 = vmatmul.mubr.f32.gmra.mrb[0].mxu0 %v669
  %v1764 = vpop.f32.mrb[0].mxu0
  %v1765 = vadd.f32 0.0, %v1764
  %v1766 = vpop.f32.mrb[0].mxu0
  %1767 = vmatprep.mubr.f32.mxu0 0.0
  %1768 = vmatmul.mubr.f32.gmra.mrb[0].mxu0 %v672
  %v1769 = vpop.f32.mrb[0].mxu0
  %v1770 = vadd.f32 0.0, %v1769
  %v1771 = vpop.f32.mrb[0].mxu0
  %1772 = vmatprep.mubr.f32.mxu0 0.0
  %1773 = vmatmul.mubr.f32.gmra.mrb[0].mxu0 %v675
  %v1774 = vpop.f32.mrb[0].mxu0
  %v1775 = vadd.f32 0.0, %v1774
  %v1776 = vpop.f32.mrb[0].mxu0
  %1777 = vmatprep.mubr.f32.mxu0 0.0
  %1778 = vmatmul.mubr.f32.gmra.mrb[0].mxu0 %v678
  %v1779 = vpop.f32.mrb[0].mxu0
  %v1780 = vadd.f32 0.0, %v1779
  %v1781 = vpop.f32.mrb[0].mxu0
  %1782 = vmatprep.mubr.f32.mxu0 0.0
  %1783 = vmatmul.mubr.f32.gmra.mrb[0].mxu0 %v681
  %v1784 = vpop.f32.mrb[0].mxu0
  %v1785 = vadd.f32 0.0, %v1784
  %v1786 = vpop.f32.mrb[0].mxu0
  %1787 = vmatprep.mubr.f32.mxu0 0.0
  %1788 = vmatmul.mubr.f32.gmra.mrb[0].mxu0 %v684
  %v1789 = vpop.f32.mrb[0].mxu0
  %v1790 = vadd.f32 0.0, %v1789
  %v1791 = vpop.f32.mrb[0].mxu0
  %1792 = vmatprep.mubr.f32.mxu0 0.0
  %1793 = vmatmul.mubr.f32.gmra.mrb[0].mxu0 %v687
  %v1794 = vpop.f32.mrb[0].mxu0
  %v1795 = vadd.f32 0.0, %v1794
  %v1796 = vpop.f32.mrb[0].mxu0
  %1797 = vmatprep.mubr.f32.mxu0 0.0
  %1798 = vmatmul.mubr.f32.gmra.mrb[0].mxu0 %v690
  %v1799 = vpop.f32.mrb[0].mxu0
  %v1800 = vadd.f32 0.0, %v1799
  %v1801 = vpop.f32.mrb[0].mxu0
  %1802 = vmatprep.mubr.f32.mxu0 0.0
  %1803 = vmatmul.mubr.f32.gmra.mrb[0].mxu0 %v693
  %v1804 = vpop.f32.mrb[0].mxu0
  %v1805 = vadd.f32 0.0, %v1804
  %v1806 = vpop.f32.mrb[0].mxu0
  %1807 = vmatprep.mubr.f32.mxu0 0.0
  %1808 = vmatmul.mubr.f32.gmra.mrb[0].mxu0 %v696
  %v1809 = vpop.f32.mrb[0].mxu0
  %v1810 = vadd.f32 0.0, %v1809
  %v1811 = vpop.f32.mrb[0].mxu0
  %1812 = vmatprep.mubr.f32.mxu0 0.0
  %1813 = vmatmul.mubr.f32.gmra.mrb[0].mxu0 %v699
  %v1814 = vpop.f32.mrb[0].mxu0
  %v1815 = vadd.f32 0.0, %v1814
  %v1816 = vpop.f32.mrb[0].mxu0
  %1817 = vmatprep.mubr.f32.mxu0 0.0
  %1818 = vmatmul.mubr.f32.gmra.mrb[0].mxu0 %v702
  %v1819 = vpop.f32.mrb[0].mxu0
  %v1820 = vadd.f32 0.0, %v1819
  %v1821 = vpop.f32.mrb[0].mxu0
  %1822 = vmatprep.mubr.f32.mxu0 0.0
  %1823 = vmatmul.mubr.f32.gmra.mrb[0].mxu0 %v705
  %v1824 = vpop.f32.mrb[0].mxu0
  %v1825 = vadd.f32 0.0, %v1824
  %v1826 = vpop.f32.mrb[0].mxu0
  %1827 = vmatprep.mubr.f32.mxu0 0.0
  %1828 = vmatmul.mubr.f32.gmra.mrb[0].mxu0 %v708
  %v1829 = vpop.f32.mrb[0].mxu0
  %v1830 = vadd.f32 0.0, %v1829
  %v1831 = vpop.f32.mrb[0].mxu0
  %1832 = vmatprep.mubr.f32.mxu0 0.0
  %1833 = vmatmul.mubr.f32.gmra.mrb[0].mxu0 %v711
  %v1834 = vpop.f32.mrb[0].mxu0
  %v1835 = vadd.f32 0.0, %v1834
  %v1836 = vpop.f32.mrb[0].mxu0
  %1837 = vmatprep.mubr.f32.mxu0 0.0
  %1838 = vmatmul.mubr.f32.gmra.mrb[0].mxu0 %v714
  %v1839 = vpop.f32.mrb[0].mxu0
  %v1840 = vadd.f32 0.0, %v1839
  %v1841 = vpop.f32.mrb[0].mxu0
  %1842 = vmatprep.mubr.f32.mxu0 0.0
  %1843 = vmatmul.mubr.f32.gmra.mrb[0].mxu0 %v717
  %v1844 = vpop.f32.mrb[0].mxu0
  %v1845 = vadd.f32 0.0, %v1844
  %v1846 = vpop.f32.mrb[0].mxu0
  %1847 = vmatprep.mubr.f32.mxu0 0.0
  %1848 = vmatmul.mubr.f32.gmra.mrb[0].mxu0 %v720
  %v1849 = vpop.f32.mrb[0].mxu0
  %v1850 = vadd.f32 0.0, %v1849
  %v1851 = vpop.f32.mrb[0].mxu0
  %1852 = vmatprep.mubr.f32.mxu0 0.0
  %1853 = vmatmul.mubr.f32.gmra.mrb[0].mxu0 %v723
  %v1854 = vpop.f32.mrb[0].mxu0
  %v1855 = vadd.f32 0.0, %v1854
  %v1856 = vpop.f32.mrb[0].mxu0
  %1857 = vmatprep.mubr.f32.mxu0 0.0
  %1858 = vmatmul.mubr.f32.gmra.mrb[0].mxu0 %v726
  %v1859 = vpop.f32.mrb[0].mxu0
  %v1860 = vadd.f32 0.0, %v1859
  %v1861 = vpop.f32.mrb[0].mxu0
  %1862 = vmatprep.mubr.f32.mxu0 0.0
  %1863 = vmatmul.mubr.f32.gmra.mrb[0].mxu0 %v729
  %v1864 = vpop.f32.mrb[0].mxu0
  %v1865 = vadd.f32 0.0, %v1864
  %v1866 = vpop.f32.mrb[0].mxu0
  %1867 = vmatprep.mubr.f32.mxu0 0.0
  %1868 = vmatmul.mubr.f32.gmra.mrb[0].mxu0 %v732
  %v1869 = vpop.f32.mrb[0].mxu0
  %v1870 = vadd.f32 0.0, %v1869
  %v1871 = vpop.f32.mrb[0].mxu0
  %1872 = vmatprep.mubr.f32.mxu0 0.0
  %1873 = vmatmul.mubr.f32.gmra.mrb[0].mxu0 %v735
  %v1874 = vpop.f32.mrb[0].mxu0
  %v1875 = vadd.f32 0.0, %v1874
  %v1876 = vpop.f32.mrb[0].mxu0
  %1877 = vmatprep.mubr.f32.mxu0 0.0
  %1878 = vmatmul.mubr.f32.gmra.mrb[0].mxu0 %v738
  %v1879 = vpop.f32.mrb[0].mxu0
  %v1880 = vadd.f32 0.0, %v1879
  %v1881 = vpop.f32.mrb[0].mxu0
  %1882 = vmatprep.mubr.f32.mxu0 0.0
  %1883 = vmatmul.mubr.f32.gmra.mrb[0].mxu0 %v741
  %v1884 = vpop.f32.mrb[0].mxu0
  %v1885 = vadd.f32 0.0, %v1884
  %v1886 = vpop.f32.mrb[0].mxu0
  %1887 = vmatprep.mubr.f32.mxu0 0.0
  %1888 = vmatmul.mubr.f32.gmra.mrb[0].mxu0 %v744
  %v1889 = vpop.f32.mrb[0].mxu0
  %v1890 = vadd.f32 0.0, %v1889
  %v1891 = vpop.f32.mrb[0].mxu0
  %1892 = vmatprep.mubr.f32.mxu0 0.0
  %1893 = vmatmul.mubr.f32.gmra.mrb[0].mxu0 %v747
  %v1894 = vpop.f32.mrb[0].mxu0
  %v1895 = vadd.f32 0.0, %v1894
  %v1896 = vpop.f32.mrb[0].mxu0
  %1897 = vmatprep.mubr.f32.mxu0 0.0
  %1898 = vmatmul.mubr.f32.gmra.mrb[0].mxu0 %v750
  %v1899 = vpop.f32.mrb[0].mxu0
  %v1900 = vadd.f32 0.0, %v1899
  %v1901 = vpop.f32.mrb[0].mxu0
  %1902 = vmatprep.mubr.f32.mxu0 0.0
  %1903 = vmatmul.mubr.f32.gmra.mrb[0].mxu0 %v753
  %v1904 = vpop.f32.mrb[0].mxu0
  %v1905 = vadd.f32 0.0, %v1904
  %v1906 = vpop.f32.mrb[0].mxu0
  %1907 = vmatprep.mubr.f32.mxu0 0.0
  %1908 = vmatmul.mubr.f32.gmra.mrb[0].mxu0 %v756
  %v1909 = vpop.f32.mrb[0].mxu0
  %v1910 = vadd.f32 0.0, %v1909
  %v1911 = vpop.f32.mrb[0].mxu0
  %1912 = vmatprep.mubr.f32.mxu0 0.0
  %1913 = vmatmul.mubr.f32.gmra.mrb[0].mxu0 %v759
  %v1914 = vpop.f32.mrb[0].mxu0
  %v1915 = vadd.f32 0.0, %v1914
  %v1916 = vpop.f32.mrb[0].mxu0
  %1917 = vmatprep.mubr.f32.mxu0 0.0
  %1918 = vmatmul.mubr.f32.gmra.mrb[0].mxu0 %v762
  %v1919 = vpop.f32.mrb[0].mxu0
  %v1920 = vadd.f32 0.0, %v1919
  %v1921 = vpop.f32.mrb[0].mxu0
  %1922 = vmatprep.mubr.f32.mxu0 0.0
  %1923 = vmatmul.mubr.f32.gmra.mrb[0].mxu0 %v765
  %v1924 = vpop.f32.mrb[0].mxu0
  %v1925 = vadd.f32 0.0, %v1924
  %v1926 = vpop.f32.mrb[0].mxu0
  %1927 = vmatprep.mubr.f32.mxu0 0.0
  %1928 = vmatmul.mubr.f32.gmra.mrb[0].mxu0 %v768
  %v1929 = vpop.f32.mrb[0].mxu0
  %v1930 = vadd.f32 0.0, %v1929
  %v1931 = vpop.f32.mrb[0].mxu0
  %1932 = vmatprep.mubr.f32.mxu0 0.0
  %1933 = vmatmul.mubr.f32.gmra.mrb[0].mxu0 %v771
  %v1934 = vpop.f32.mrb[0].mxu0
  %v1935 = vadd.f32 0.0, %v1934
  %v1936 = vpop.f32.mrb[0].mxu0
  %1937 = vmatprep.mubr.f32.mxu0 0.0
  %1938 = vmatmul.mubr.f32.gmra.mrb[0].mxu0 %v774
  %v1939 = vpop.f32.mrb[0].mxu0
  %v1940 = vadd.f32 0.0, %v1939
  %v1941 = vpop.f32.mrb[0].mxu0
  %1942 = vmatprep.mubr.f32.mxu0 0.0
  %1943 = vmatmul.mubr.f32.gmra.mrb[0].mxu0 %v777
  %v1944 = vpop.f32.mrb[0].mxu0
  %v1945 = vadd.f32 0.0, %v1944
  %v1946 = vpop.f32.mrb[0].mxu0
  %1947 = vmatprep.mubr.f32.mxu0 0.0
  %1948 = vmatmul.mubr.f32.gmra.mrb[0].mxu0 %v780
  %v1949 = vpop.f32.mrb[0].mxu0
  %v1950 = vadd.f32 0.0, %v1949
  %v1951 = vpop.f32.mrb[0].mxu0
  %1952 = vmatprep.mubr.f32.mxu0 0.0
  %1953 = vmatmul.mubr.f32.gmra.mrb[0].mxu0 %v783
  %v1954 = vpop.f32.mrb[0].mxu0
  %v1955 = vadd.f32 0.0, %v1954
  %v1956 = vpop.f32.mrb[0].mxu0
  %1957 = vmatprep.mubr.f32.mxu0 0.0
  %1958 = vmatmul.mubr.f32.gmra.mrb[0].mxu0 %v786
  %v1959 = vpop.f32.mrb[0].mxu0
  %v1960 = vadd.f32 0.0, %v1959
  %v1961 = vpop.f32.mrb[0].mxu0
  %1962 = vmatprep.mubr.f32.mxu0 0.0
  %1963 = vmatmul.mubr.f32.gmra.mrb[0].mxu0 %v789
  %v1964 = vpop.f32.mrb[0].mxu0
  %v1965 = vadd.f32 0.0, %v1964
  %v1966 = vpop.f32.mrb[0].mxu0
  %1967 = vmatprep.mubr.f32.mxu0 0.0
  %1968 = vmatmul.mubr.f32.gmra.mrb[0].mxu0 %v792
  %v1969 = vpop.f32.mrb[0].mxu0
  %v1970 = vadd.f32 0.0, %v1969
  %v1971 = vpop.f32.mrb[0].mxu0
  %1972 = vmatprep.mubr.f32.mxu0 0.0
  %1973 = vmatmul.mubr.f32.gmra.mrb[0].mxu0 %v795
  %v1974 = vpop.f32.mrb[0].mxu0
  %v1975 = vadd.f32 0.0, %v1974
  %v1976 = vpop.f32.mrb[0].mxu0
  %1977 = vmatprep.mubr.f32.mxu0 0.0
  %1978 = vmatmul.mubr.f32.gmra.mrb[0].mxu0 %v798
  %v1979 = vpop.f32.mrb[0].mxu0
  %v1980 = vadd.f32 0.0, %v1979
  %v1981 = vpop.f32.mrb[0].mxu0
  %1982 = vmatprep.mubr.f32.mxu0 0.0
  %1983 = vmatmul.mubr.f32.gmra.mrb[0].mxu0 %v801
  %v1984 = vpop.f32.mrb[0].mxu0
  %v1985 = vadd.f32 0.0, %v1984
  %v1986 = vpop.f32.mrb[0].mxu0
  %1987 = vmatprep.mubr.f32.mxu0 0.0
  %1988 = vmatmul.mubr.f32.gmra.mrb[0].mxu0 %v804
  %v1989 = vpop.f32.mrb[0].mxu0
  %v1990 = vadd.f32 0.0, %v1989
  %v1991 = vpop.f32.mrb[0].mxu0
  %1992 = vmatprep.mubr.f32.mxu0 0.0
  %1993 = vmatmul.mubr.f32.gmra.mrb[0].mxu0 %v807
  %v1994 = vpop.f32.mrb[0].mxu0
  %v1995 = vadd.f32 0.0, %v1994
  %v1996 = vpop.f32.mrb[0].mxu0
  %1997 = vmatprep.mubr.f32.mxu0 0.0
  %1998 = vmatmul.mubr.f32.gmra.mrb[0].mxu0 %v810
  %v1999 = vpop.f32.mrb[0].mxu0
  %v2000 = vadd.f32 0.0, %v1999
  %v2001 = vpop.f32.mrb[0].mxu0
  %2002 = vmatprep.mubr.f32.mxu0 0.0
  %2003 = vmatmul.mubr.f32.gmra.mrb[0].mxu0 %v813
  %v2004 = vpop.f32.mrb[0].mxu0
  %v2005 = vadd.f32 0.0, %v2004
  %v2006 = vpop.f32.mrb[0].mxu0
  %2007 = vmatprep.mubr.f32.mxu0 0.0
  %2008 = vmatmul.mubr.f32.gmra.mrb[0].mxu0 %v816
  %v2009 = vpop.f32.mrb[0].mxu0
  %v2010 = vadd.f32 0.0, %v2009
  %v2011 = vpop.f32.mrb[0].mxu0
  %2012 = vmatprep.mubr.f32.mxu0 0.0
  %2013 = vmatmul.mubr.f32.gmra.mrb[0].mxu0 %v819
  %v2014 = vpop.f32.mrb[0].mxu0
  %v2015 = vadd.f32 0.0, %v2014
  %v2016 = vpop.f32.mrb[0].mxu0
  %2017 = vmatprep.mubr.f32.mxu0 0.0
  %2018 = vmatmul.mubr.f32.gmra.mrb[0].mxu0 %v822
  %v2019 = vpop.f32.mrb[0].mxu0
  %v2020 = vadd.f32 0.0, %v2019
  %v2021 = vpop.f32.mrb[0].mxu0
  %2022 = vmatprep.mubr.f32.mxu0 0.0
  %2023 = vmatmul.mubr.f32.gmra.mrb[0].mxu0 %v825
  %v2024 = vpop.f32.mrb[0].mxu0
  %v2025 = vadd.f32 0.0, %v2024
  %v2026 = vpop.f32.mrb[0].mxu0
  %2027 = vmatprep.mubr.f32.mxu0 0.0
  %2028 = vmatmul.mubr.f32.gmra.mrb[0].mxu0 %v828
  %v2029 = vpop.f32.mrb[0].mxu0
  %v2030 = vadd.f32 0.0, %v2029
  %v2031 = vpop.f32.mrb[0].mxu0
  %2032 = vmatprep.mubr.f32.mxu0 0.0
  %2033 = vmatmul.mubr.f32.gmra.mrb[0].mxu0 %v831
  %v2034 = vpop.f32.mrb[0].mxu0
  %v2035 = vadd.f32 0.0, %v2034
  %v2036 = vpop.f32.mrb[0].mxu0
  %2037 = vmatprep.mubr.f32.mxu0 0.0
  %2038 = vmatmul.mubr.f32.gmra.mrb[0].mxu0 %v834
  %v2039 = vpop.f32.mrb[0].mxu0
  %v2040 = vadd.f32 0.0, %v2039
  %v2041 = vpop.f32.mrb[0].mxu0
  %2042 = vmatprep.mubr.f32.mxu0 0.0
  %2043 = vmatmul.mubr.f32.gmra.mrb[0].mxu0 %v837
  %v2044 = vpop.f32.mrb[0].mxu0
  %v2045 = vadd.f32 0.0, %v2044
  %v2046 = vpop.f32.mrb[0].mxu0
  %2047 = vmatprep.mubr.f32.mxu0 0.0
  %2048 = vmatmul.mubr.f32.gmra.mrb[0].mxu0 %v840
  %v2049 = vpop.f32.mrb[0].mxu0
  %v2050 = vadd.f32 0.0, %v2049
  %v2051 = vpop.f32.mrb[0].mxu0
  %2052 = vmatprep.mubr.f32.mxu0 0.0
  %2053 = vmatmul.mubr.f32.gmra.mrb[0].mxu0 %v843
  %v2054 = vpop.f32.mrb[0].mxu0
  %v2055 = vadd.f32 0.0, %v2054
  %v2056 = vpop.f32.mrb[0].mxu0
  %2057 = vmatprep.mubr.f32.mxu0 0.0
  %2058 = vmatmul.mubr.f32.gmra.mrb[0].mxu0 %v846
  %v2059 = vpop.f32.mrb[0].mxu0
  %v2060 = vadd.f32 0.0, %v2059
  %v2061 = vpop.f32.mrb[0].mxu0
  %2062 = vmatprep.mubr.f32.mxu0 0.0
  %2063 = vmatmul.mubr.f32.gmra.mrb[0].mxu0 %v849
  %v2064 = vpop.f32.mrb[0].mxu0
  %v2065 = vadd.f32 0.0, %v2064
  %v2066 = vpop.f32.mrb[0].mxu0
  %2067 = vmatprep.mubr.f32.mxu0 0.0
  %2068 = vmatmul.mubr.f32.gmra.mrb[0].mxu0 %v852
  %v2069 = vpop.f32.mrb[0].mxu0
  %v2070 = vadd.f32 0.0, %v2069
  %v2071 = vpop.f32.mrb[0].mxu0
  %2072 = vmatprep.mubr.f32.mxu0 0.0
  %2073 = vmatmul.mubr.f32.gmra.mrb[0].mxu0 %v855
  %v2074 = vpop.f32.mrb[0].mxu0
  %v2075 = vadd.f32 0.0, %v2074
  %v2076 = vpop.f32.mrb[0].mxu0
  %2077 = vmatprep.mubr.f32.mxu0 0.0
  %2078 = vmatmul.mubr.f32.gmra.mrb[0].mxu0 %v858
  %v2079 = vpop.f32.mrb[0].mxu0
  %v2080 = vadd.f32 0.0, %v2079
  %v2081 = vpop.f32.mrb[0].mxu0
  %2082 = vmatprep.mubr.f32.mxu0 0.0
  %2083 = vmatmul.mubr.f32.gmra.mrb[0].mxu0 %v861
  %v2084 = vpop.f32.mrb[0].mxu0
  %v2085 = vadd.f32 0.0, %v2084
  %v2086 = vpop.f32.mrb[0].mxu0
  %2087 = vmatprep.mubr.f32.mxu0 0.0
  %2088 = vmatmul.mubr.f32.gmra.mrb[0].mxu0 %v864
  %v2089 = vpop.f32.mrb[0].mxu0
  %v2090 = vadd.f32 0.0, %v2089
  %v2091 = vpop.f32.mrb[0].mxu0
  %2092 = vmatprep.mubr.f32.mxu0 0.0
  %2093 = vmatmul.mubr.f32.gmra.mrb[0].mxu0 %v867
  %v2094 = vpop.f32.mrb[0].mxu0
  %v2095 = vadd.f32 0.0, %v2094
  %v2096 = vpop.f32.mrb[0].mxu0
  %2097 = vmatprep.mubr.f32.mxu0 0.0
  %2098 = vmatmul.mubr.f32.gmra.mrb[0].mxu0 %v870
  %v2099 = vpop.f32.mrb[0].mxu0
  %v2100 = vadd.f32 0.0, %v2099
  %v2101 = vpop.f32.mrb[0].mxu0
  %2102 = vmatprep.mubr.f32.mxu0 0.0
  %2103 = vmatmul.mubr.f32.gmra.mrb[0].mxu0 %v873
  %v2104 = vpop.f32.mrb[0].mxu0
  %v2105 = vadd.f32 0.0, %v2104
  %v2106 = vpop.f32.mrb[0].mxu0
  %2107 = vmatprep.mubr.f32.mxu0 0.0
  %2108 = vmatmul.mubr.f32.gmra.mrb[0].mxu0 %v876
  %v2109 = vpop.f32.mrb[0].mxu0
  %v2110 = vadd.f32 0.0, %v2109
  %v2111 = vpop.f32.mrb[0].mxu0
  %2112 = vmatprep.mubr.f32.mxu0 0.0
  %2113 = vmatmul.mubr.f32.gmra.mrb[0].mxu0 %v879
  %v2114 = vpop.f32.mrb[0].mxu0
  %v2115 = vadd.f32 0.0, %v2114
  %v2116 = vpop.f32.mrb[0].mxu0
  %2117 = vmatprep.mubr.f32.mxu0 0.0
  %2118 = vmatmul.mubr.f32.gmra.mrb[0].mxu0 %v882
  %v2119 = vpop.f32.mrb[0].mxu0
  %v2120 = vadd.f32 0.0, %v2119
  %v2121 = vpop.f32.mrb[0].mxu0
  %2122 = vmatprep.mubr.f32.mxu0 0.0
  %2123 = vmatmul.mubr.f32.gmra.mrb[0].mxu0 %v885
  %v2124 = vpop.f32.mrb[0].mxu0
  %v2125 = vadd.f32 0.0, %v2124
  %v2126 = vpop.f32.mrb[0].mxu0
  %2127 = vmatprep.mubr.f32.mxu0 0.0
  %2128 = vmatmul.mubr.f32.gmra.mrb[0].mxu0 %v888
  %v2129 = vpop.f32.mrb[0].mxu0
  %v2130 = vadd.f32 0.0, %v2129
  %v2131 = vpop.f32.mrb[0].mxu0
  %2132 = vmatprep.mubr.f32.mxu0 0.0
  %2133 = vmatmul.mubr.f32.gmra.mrb[0].mxu0 %v891
  %v2134 = vpop.f32.mrb[0].mxu0
  %v2135 = vadd.f32 0.0, %v2134
  %v2136 = vpop.f32.mrb[0].mxu0
  %2137 = vmatprep.mubr.f32.mxu0 0.0
  %2138 = vmatmul.mubr.f32.gmra.mrb[0].mxu0 %v894
  %v2139 = vpop.f32.mrb[0].mxu0
  %v2140 = vadd.f32 0.0, %v2139
  %v2141 = vpop.f32.mrb[0].mxu0
  %2142 = vmatprep.mubr.f32.mxu0 0.0
  %2143 = vmatmul.mubr.f32.gmra.mrb[0].mxu0 %v897
  %v2144 = vpop.f32.mrb[0].mxu0
  %v2145 = vadd.f32 0.0, %v2144
  %v2146 = vpop.f32.mrb[0].mxu0
  %2147 = vmatprep.mubr.f32.mxu0 0.0
  %2148 = vmatmul.mubr.f32.gmra.mrb[0].mxu0 %v900
  %v2149 = vpop.f32.mrb[0].mxu0
  %v2150 = vadd.f32 0.0, %v2149
  %v2151 = vpop.f32.mrb[0].mxu0
  %2152 = vmatprep.mubr.f32.mxu0 0.0
  %2153 = vmatmul.mubr.f32.gmra.mrb[0].mxu0 %v903
  %v2154 = vpop.f32.mrb[0].mxu0
  %v2155 = vadd.f32 0.0, %v2154
  %v2156 = vpop.f32.mrb[0].mxu0
  %2157 = vmatprep.mubr.f32.mxu0 0.0
  %2158 = vmatmul.mubr.f32.gmra.mrb[0].mxu0 %v906
  %v2159 = vpop.f32.mrb[0].mxu0
  %v2160 = vadd.f32 0.0, %v2159
  %v2161 = vpop.f32.mrb[0].mxu0
  %2162 = vmatprep.mubr.f32.mxu0 0.0
  %2163 = vmatmul.mubr.f32.gmra.mrb[0].mxu0 %v909
  %v2164 = vpop.f32.mrb[0].mxu0
  %v2165 = vadd.f32 0.0, %v2164
  %v2166 = vpop.f32.mrb[0].mxu0
  %2167 = vmatprep.mubr.f32.mxu0 0.0
  %2168 = vmatmul.mubr.f32.gmra.mrb[0].mxu0 %v912
  %v2169 = vpop.f32.mrb[0].mxu0
  %v2170 = vadd.f32 0.0, %v2169
  %v2171 = vpop.f32.mrb[0].mxu0
  %2172 = vmatprep.mubr.f32.mxu0 0.0
  %2173 = vmatmul.mubr.f32.gmra.mrb[0].mxu0 %v915
  %v2174 = vpop.f32.mrb[0].mxu0
  %v2175 = vadd.f32 0.0, %v2174
  %v2176 = vpop.f32.mrb[0].mxu0
  %2177 = vmatprep.mubr.f32.mxu0 0.0
  %2178 = vmatmul.mubr.f32.gmra.mrb[0].mxu0 %v918
  %v2179 = vpop.f32.mrb[0].mxu0
  %v2180 = vadd.f32 0.0, %v2179
  %v2181 = vpop.f32.mrb[0].mxu0
  %2182 = vmatprep.mubr.f32.mxu0 0.0
  %2183 = vmatmul.mubr.f32.gmra.mrb[0].mxu0 %v921
  %v2184 = vpop.f32.mrb[0].mxu0
  %v2185 = vadd.f32 0.0, %v2184
  %v2186 = vpop.f32.mrb[0].mxu0
  %2187 = vmatprep.mubr.f32.mxu0 0.0
  %2188 = vmatmul.mubr.f32.gmra.mrb[0].mxu0 %v924
  %v2189 = vpop.f32.mrb[0].mxu0
  %v2190 = vadd.f32 0.0, %v2189
  %v2191 = vpop.f32.mrb[0].mxu0
  %2192 = vmatprep.mubr.f32.mxu0 0.0
  %2193 = vmatmul.mubr.f32.gmra.mrb[0].mxu0 %v927
  %v2194 = vpop.f32.mrb[0].mxu0
  %v2195 = vadd.f32 0.0, %v2194
  %v2196 = vpop.f32.mrb[0].mxu0
  %2197 = vmatprep.mubr.f32.mxu0 0.0
  %2198 = vmatmul.mubr.f32.gmra.mrb[0].mxu0 %v930
  %v2199 = vpop.f32.mrb[0].mxu0
  %v2200 = vadd.f32 0.0, %v2199
  %v2201 = vpop.f32.mrb[0].mxu0
  %2202 = vmatprep.mubr.f32.mxu0 0.0
  %2203 = vmatmul.mubr.f32.gmra.mrb[0].mxu0 %v933
  %v2204 = vpop.f32.mrb[0].mxu0
  %v2205 = vadd.f32 0.0, %v2204
  %v2206 = vpop.f32.mrb[0].mxu0
  %2207 = vmatprep.mubr.f32.mxu0 0.0
  %2208 = vmatmul.mubr.f32.gmra.mrb[0].mxu0 %v936
  %v2209 = vpop.f32.mrb[0].mxu0
  %v2210 = vadd.f32 0.0, %v2209
  %v2211 = vpop.f32.mrb[0].mxu0
  %2212 = vmatprep.mubr.f32.mxu0 0.0
  %2213 = vmatmul.mubr.f32.gmra.mrb[0].mxu0 %v939
  %v2214 = vpop.f32.mrb[0].mxu0
  %v2215 = vadd.f32 0.0, %v2214
  %v2216 = vpop.f32.mrb[0].mxu0
  %2217 = vmatprep.mubr.f32.mxu0 0.0
  %2218 = vmatmul.mubr.f32.gmra.mrb[0].mxu0 %v942
  %v2219 = vpop.f32.mrb[0].mxu0
  %v2220 = vadd.f32 0.0, %v2219
  %v2221 = vpop.f32.mrb[0].mxu0
  %2222 = vmatprep.mubr.f32.mxu0 0.0
  %2223 = vmatmul.mubr.f32.gmra.mrb[0].mxu0 %v945
  %v2224 = vpop.f32.mrb[0].mxu0
  %v2225 = vadd.f32 0.0, %v2224
  %v2226 = vpop.f32.mrb[0].mxu0
  %2227 = vmatprep.mubr.f32.mxu0 0.0
  %2228 = vmatmul.mubr.f32.gmra.mrb[0].mxu0 %v948
  %v2229 = vpop.f32.mrb[0].mxu0
  %v2230 = vadd.f32 0.0, %v2229
  %v2231 = vpop.f32.mrb[0].mxu0
  %2232 = vmatprep.mubr.f32.mxu0 0.0
  %2233 = vmatmul.mubr.f32.gmra.mrb[0].mxu0 %v951
  %v2234 = vpop.f32.mrb[0].mxu0
  %v2235 = vadd.f32 0.0, %v2234
  %v2236 = vpop.f32.mrb[0].mxu0
  %2237 = vmatprep.mubr.f32.mxu0 0.0
  %2238 = vmatmul.mubr.f32.gmra.mrb[0].mxu0 %v954
  %v2239 = vpop.f32.mrb[0].mxu0
  %v2240 = vadd.f32 0.0, %v2239
  %v2241 = vpop.f32.mrb[0].mxu0
  %2242 = vmatprep.mubr.f32.mxu0 0.0
  %2243 = vmatmul.mubr.f32.gmra.mrb[0].mxu0 %v957
  %v2244 = vpop.f32.mrb[0].mxu0
  %v2245 = vadd.f32 0.0, %v2244
  %v2246 = vpop.f32.mrb[0].mxu0
  %2247 = vmatprep.mubr.f32.mxu0 0.0
  %2248 = vmatmul.mubr.f32.gmra.mrb[0].mxu0 %v960
  %v2249 = vpop.f32.mrb[0].mxu0
  %v2250 = vadd.f32 0.0, %v2249
  %v2251 = vpop.f32.mrb[0].mxu0
  %2252 = vmatprep.mubr.f32.mxu0 0.0
  %2253 = vmatmul.mubr.f32.gmra.mrb[0].mxu0 %v963
  %v2254 = vpop.f32.mrb[0].mxu0
  %v2255 = vadd.f32 0.0, %v2254
  %v2256 = vpop.f32.mrb[0].mxu0
  %2257 = vmatprep.mubr.f32.mxu0 0.0
  %2258 = vmatmul.mubr.f32.gmra.mrb[0].mxu0 %v966
  %v2259 = vpop.f32.mrb[0].mxu0
  %v2260 = vadd.f32 0.0, %v2259
  %v2261 = vpop.f32.mrb[0].mxu0
  %2262 = vmatprep.mubr.f32.mxu0 0.0
  %2263 = vmatmul.mubr.f32.gmra.mrb[0].mxu0 %v969
  %v2264 = vpop.f32.mrb[0].mxu0
  %v2265 = vadd.f32 0.0, %v2264
  %v2266 = vpop.f32.mrb[0].mxu0
  %2267 = vmatprep.mubr.f32.mxu0 0.0
  %2268 = vmatmul.mubr.f32.gmra.mrb[0].mxu0 %v972
  %v2269 = vpop.f32.mrb[0].mxu0
  %v2270 = vadd.f32 0.0, %v2269
  %v2271 = vpop.f32.mrb[0].mxu0
  %2272 = vmatprep.mubr.f32.mxu0 0.0
  %2273 = vmatmul.mubr.f32.gmra.mrb[0].mxu0 %v975
  %v2274 = vpop.f32.mrb[0].mxu0
  %v2275 = vadd.f32 0.0, %v2274
  %v2276 = vpop.f32.mrb[0].mxu0
  %2277 = vmatprep.mubr.f32.mxu0 0.0
  %2278 = vmatmul.mubr.f32.gmra.mrb[0].mxu0 %v978
  %v2279 = vpop.f32.mrb[0].mxu0
  %v2280 = vadd.f32 0.0, %v2279
  %v2281 = vpop.f32.mrb[0].mxu0
  %2282 = vmatprep.mubr.f32.mxu0 0.0
  %2283 = vmatmul.mubr.f32.gmra.mrb[0].mxu0 %v981
  %v2284 = vpop.f32.mrb[0].mxu0
  %v2285 = vadd.f32 0.0, %v2284
  %v2286 = vpop.f32.mrb[0].mxu0
  %2287 = vmatprep.mubr.f32.mxu0 0.0
  %2288 = vmatmul.mubr.f32.gmra.mrb[0].mxu0 %v984
  %v2289 = vpop.f32.mrb[0].mxu0
  %v2290 = vadd.f32 0.0, %v2289
  %v2291 = vpop.f32.mrb[0].mxu0
  %2292 = vmatprep.mubr.f32.mxu0 0.0
  %2293 = vmatmul.mubr.f32.gmra.mrb[0].mxu0 %v987
  %v2294 = vpop.f32.mrb[0].mxu0
  %v2295 = vadd.f32 0.0, %v2294
  %v2296 = vpop.f32.mrb[0].mxu0
  %2297 = vmatprep.mubr.f32.mxu0 0.0
  %2298 = vmatmul.mubr.f32.gmra.mrb[0].mxu0 %v990
  %v2299 = vpop.f32.mrb[0].mxu0
  %v2300 = vadd.f32 0.0, %v2299
  %v2301 = vpop.f32.mrb[0].mxu0
  %2302 = vmatprep.mubr.f32.mxu0 0.0
  %2303 = vmatmul.mubr.f32.gmra.mrb[0].mxu0 %v993
  %v2304 = vpop.f32.mrb[0].mxu0
  %v2305 = vadd.f32 0.0, %v2304
  %v2306 = vpop.f32.mrb[0].mxu0
  %2307 = vmatprep.mubr.f32.mxu0 0.0
  %2308 = vmatmul.mubr.f32.gmra.mrb[0].mxu0 %v996
  %v2309 = vpop.f32.mrb[0].mxu0
  %v2310 = vadd.f32 0.0, %v2309
  %v2311 = vpop.f32.mrb[0].mxu0
  %2312 = vmatprep.mubr.f32.mxu0 0.0
  %2313 = vmatmul.mubr.f32.gmra.mrb[0].mxu0 %v999
  %v2314 = vpop.f32.mrb[0].mxu0
  %v2315 = vadd.f32 0.0, %v2314
  %v2316 = vpop.f32.mrb[0].mxu0
  %2317 = vmatprep.mubr.f32.mxu0 0.0
  %2318 = vmatmul.mubr.f32.gmra.mrb[0].mxu0 %v1002
  %v2319 = vpop.f32.mrb[0].mxu0
  %v2320 = vadd.f32 0.0, %v2319
  %v2321 = vpop.f32.mrb[0].mxu0
  %2322 = vmatprep.mubr.f32.mxu0 0.0
  %2323 = vmatmul.mubr.f32.gmra.mrb[0].mxu0 %v1005
  %v2324 = vpop.f32.mrb[0].mxu0
  %v2325 = vadd.f32 0.0, %v2324
  %v2326 = vpop.f32.mrb[0].mxu0
  %2327 = vmatprep.mubr.f32.mxu0 0.0
  %2328 = vmatmul.mubr.f32.gmra.mrb[0].mxu0 %v1008
  %v2329 = vpop.f32.mrb[0].mxu0
  %v2330 = vadd.f32 0.0, %v2329
  %v2331 = vpop.f32.mrb[0].mxu0
  %2332 = vmatprep.mubr.f32.mxu0 0.0
  %2333 = vmatmul.mubr.f32.gmra.mrb[0].mxu0 %v1011
  %v2334 = vpop.f32.mrb[0].mxu0
  %v2335 = vadd.f32 0.0, %v2334
  %v2336 = vpop.f32.mrb[0].mxu0
  %2337 = vmatprep.mubr.f32.mxu0 0.0
  %2338 = vmatmul.mubr.f32.gmra.mrb[0].mxu0 %v1014
  %v2339 = vpop.f32.mrb[0].mxu0
  %v2340 = vadd.f32 0.0, %v2339
  %v2341 = vpop.f32.mrb[0].mxu0
  %2342 = vmatprep.mubr.f32.mxu0 0.0
  %2343 = vmatmul.mubr.f32.gmra.mrb[0].mxu0 %v1017
  %v2344 = vpop.f32.mrb[0].mxu0
  %v2345 = vadd.f32 0.0, %v2344
  %v2346 = vpop.f32.mrb[0].mxu0
  %2347 = vmatprep.mubr.f32.mxu0 0.0
  %2348 = vmatmul.mubr.f32.gmra.mrb[0].mxu0 %v1020
  %v2349 = vpop.f32.mrb[0].mxu0
  %v2350 = vadd.f32 0.0, %v2349
  %v2351 = vpop.f32.mrb[0].mxu0
  %2352 = vmatprep.mubr.f32.mxu0 0.0
  %2353 = vmatmul.mubr.f32.gmra.mrb[0].mxu0 %v1023
  %v2354 = vpop.f32.mrb[0].mxu0
  %v2355 = vadd.f32 0.0, %v2354
  %v2356 = vpop.f32.mrb[0].mxu0
  %2357 = vmatprep.mubr.f32.mxu0 0.0
  %2358 = vmatmul.mubr.f32.gmra.mrb[0].mxu0 %v1026
  %v2359 = vpop.f32.mrb[0].mxu0
  %v2360 = vadd.f32 0.0, %v2359
  %v2361 = vpop.f32.mrb[0].mxu0
  %2362 = vmatprep.mubr.f32.mxu0 0.0
  %2363 = vmatmul.mubr.f32.gmra.mrb[0].mxu0 %v1029
  %v2364 = vpop.f32.mrb[0].mxu0
  %v2365 = vadd.f32 0.0, %v2364
  %v2366 = vpop.f32.mrb[0].mxu0
  %2367 = vmatprep.mubr.f32.mxu0 0.0
  %2368 = vmatmul.mubr.f32.gmra.mrb[0].mxu0 %v1032
  %v2369 = vpop.f32.mrb[0].mxu0
  %v2370 = vadd.f32 0.0, %v2369
  %v2371 = vpop.f32.mrb[0].mxu0
  %2372 = vmatprep.mubr.f32.mxu0 0.0
  %2373 = vmatmul.mubr.f32.gmra.mrb[0].mxu0 %v1035
  %v2374 = vpop.f32.mrb[0].mxu0
  %v2375 = vadd.f32 0.0, %v2374
  %v2376 = vpop.f32.mrb[0].mxu0
  %2377 = vmatprep.mubr.f32.mxu0 0.0
  %2378 = vmatmul.mubr.f32.gmra.mrb[0].mxu0 %v1038
  %v2379 = vpop.f32.mrb[0].mxu0
  %v2380 = vadd.f32 0.0, %v2379
  %v2381 = vpop.f32.mrb[0].mxu0
  %2382 = vmatprep.mubr.f32.mxu0 0.0
  %2383 = vmatmul.mubr.f32.gmra.mrb[0].mxu0 %v1041
  %v2384 = vpop.f32.mrb[0].mxu0
  %v2385 = vadd.f32 0.0, %v2384
  %v2386 = vpop.f32.mrb[0].mxu0
  %2387 = vdwg.mxu0
  %v2388 = vmax.f32 %v1110, 0.0
  %v2389 = vmax.f32 %v1115, 0.0
  %v2390 = vmax.f32 %v1120, 0.0
  %v2391 = vmax.f32 %v1125, 0.0
  %v2392 = vmax.f32 %v1130, 0.0
  %v2393 = vmax.f32 %v1135, 0.0
  %v2394 = vmax.f32 %v1140, 0.0
  %v2395 = vmax.f32 %v1145, 0.0
  %v2396 = vmax.f32 %v1150, 0.0
  %v2397 = vmax.f32 %v1155, 0.0
  %v2398 = vmax.f32 %v1160, 0.0
  %v2399 = vmax.f32 %v1165, 0.0
  %v2400 = vmax.f32 %v1170, 0.0
  %v2401 = vmax.f32 %v1175, 0.0
  %v2402 = vmax.f32 %v1180, 0.0
  %v2403 = vmax.f32 %v1185, 0.0
  %v2404 = vmax.f32 %v1190, 0.0
  %v2405 = vmax.f32 %v1195, 0.0
  %v2406 = vmax.f32 %v1200, 0.0
  %v2407 = vmax.f32 %v1205, 0.0
  %v2408 = vmax.f32 %v1210, 0.0
  %v2409 = vmax.f32 %v1215, 0.0
  %v2410 = vmax.f32 %v1220, 0.0
  %v2411 = vmax.f32 %v1225, 0.0
  %v2412 = vmax.f32 %v1230, 0.0
  %v2413 = vmax.f32 %v1235, 0.0
  %v2414 = vmax.f32 %v1240, 0.0
  %v2415 = vmax.f32 %v1245, 0.0
  %v2416 = vmax.f32 %v1250, 0.0
  %v2417 = vmax.f32 %v1255, 0.0
  %v2418 = vmax.f32 %v1260, 0.0
  %v2419 = vmax.f32 %v1265, 0.0
  %v2420 = vmax.f32 %v1270, 0.0
  %v2421 = vmax.f32 %v1275, 0.0
  %v2422 = vmax.f32 %v1280, 0.0
  %v2423 = vmax.f32 %v1285, 0.0
  %v2424 = vmax.f32 %v1290, 0.0
  %v2425 = vmax.f32 %v1295, 0.0
  %v2426 = vmax.f32 %v1300, 0.0
  %v2427 = vmax.f32 %v1305, 0.0
  %v2428 = vmax.f32 %v1310, 0.0
  %v2429 = vmax.f32 %v1315, 0.0
  %v2430 = vmax.f32 %v1320, 0.0
  %v2431 = vmax.f32 %v1325, 0.0
  %v2432 = vmax.f32 %v1330, 0.0
  %v2433 = vmax.f32 %v1335, 0.0
  %v2434 = vmax.f32 %v1340, 0.0
  %v2435 = vmax.f32 %v1345, 0.0
  %v2436 = vmax.f32 %v1350, 0.0
  %v2437 = vmax.f32 %v1355, 0.0
  %v2438 = vmax.f32 %v1360, 0.0
  %v2439 = vmax.f32 %v1365, 0.0
  %v2440 = vmax.f32 %v1370, 0.0
  %v2441 = vmax.f32 %v1375, 0.0
  %v2442 = vmax.f32 %v1380, 0.0
  %v2443 = vmax.f32 %v1385, 0.0
  %v2444 = vmax.f32 %v1390, 0.0
  %v2445 = vmax.f32 %v1395, 0.0
  %v2446 = vmax.f32 %v1400, 0.0
  %v2447 = vmax.f32 %v1405, 0.0
  %v2448 = vmax.f32 %v1410, 0.0
  %v2449 = vmax.f32 %v1415, 0.0
  %v2450 = vmax.f32 %v1420, 0.0
  %v2451 = vmax.f32 %v1425, 0.0
  %v2452 = vmax.f32 %v1430, 0.0
  %v2453 = vmax.f32 %v1435, 0.0
  %v2454 = vmax.f32 %v1440, 0.0
  %v2455 = vmax.f32 %v1445, 0.0
  %v2456 = vmax.f32 %v1450, 0.0
  %v2457 = vmax.f32 %v1455, 0.0
  %v2458 = vmax.f32 %v1460, 0.0
  %v2459 = vmax.f32 %v1465, 0.0
  %v2460 = vmax.f32 %v1470, 0.0
  %v2461 = vmax.f32 %v1475, 0.0
  %v2462 = vmax.f32 %v1480, 0.0
  %v2463 = vmax.f32 %v1485, 0.0
  %v2464 = vmax.f32 %v1490, 0.0
  %v2465 = vmax.f32 %v1495, 0.0
  %v2466 = vmax.f32 %v1500, 0.0
  %v2467 = vmax.f32 %v1505, 0.0
  %v2468 = vmax.f32 %v1510, 0.0
  %v2469 = vmax.f32 %v1515, 0.0
  %v2470 = vmax.f32 %v1520, 0.0
  %v2471 = vmax.f32 %v1525, 0.0
  %v2472 = vmax.f32 %v1530, 0.0
  %v2473 = vmax.f32 %v1535, 0.0
  %v2474 = vmax.f32 %v1540, 0.0
  %v2475 = vmax.f32 %v1545, 0.0
  %v2476 = vmax.f32 %v1550, 0.0
  %v2477 = vmax.f32 %v1555, 0.0
  %v2478 = vmax.f32 %v1560, 0.0
  %v2479 = vmax.f32 %v1565, 0.0
  %v2480 = vmax.f32 %v1570, 0.0
  %v2481 = vmax.f32 %v1575, 0.0
  %v2482 = vmax.f32 %v1580, 0.0
  %v2483 = vmax.f32 %v1585, 0.0
  %v2484 = vmax.f32 %v1590, 0.0
  %v2485 = vmax.f32 %v1595, 0.0
  %v2486 = vmax.f32 %v1600, 0.0
  %v2487 = vmax.f32 %v1605, 0.0
  %v2488 = vmax.f32 %v1610, 0.0
  %v2489 = vmax.f32 %v1615, 0.0
  %v2490 = vmax.f32 %v1620, 0.0
  %v2491 = vmax.f32 %v1625, 0.0
  %v2492 = vmax.f32 %v1630, 0.0
  %v2493 = vmax.f32 %v1635, 0.0
  %v2494 = vmax.f32 %v1640, 0.0
  %v2495 = vmax.f32 %v1645, 0.0
  %v2496 = vmax.f32 %v1650, 0.0
  %v2497 = vmax.f32 %v1655, 0.0
  %v2498 = vmax.f32 %v1660, 0.0
  %v2499 = vmax.f32 %v1665, 0.0
  %v2500 = vmax.f32 %v1670, 0.0
  %v2501 = vmax.f32 %v1675, 0.0
  %v2502 = vmax.f32 %v1680, 0.0
  %v2503 = vmax.f32 %v1685, 0.0
  %v2504 = vmax.f32 %v1690, 0.0
  %v2505 = vmax.f32 %v1695, 0.0
  %v2506 = vmax.f32 %v1700, 0.0
  %v2507 = vmax.f32 %v1705, 0.0
  %v2508 = vmax.f32 %v1710, 0.0
  %v2509 = vmax.f32 %v1715, 0.0
  %v2510 = vmax.f32 %v1720, 0.0
  %v2511 = vmax.f32 %v1725, 0.0
  %v2512 = vmax.f32 %v1730, 0.0
  %v2513 = vmax.f32 %v1735, 0.0
  %v2514 = vmax.f32 %v1740, 0.0
  %v2515 = vmax.f32 %v1745, 0.0
  %v2516 = vmax.f32 %v1750, 0.0
  %v2517 = vmax.f32 %v1755, 0.0
  %v2518 = vmax.f32 %v1760, 0.0
  %v2519 = vmax.f32 %v1765, 0.0
  %v2520 = vmax.f32 %v1770, 0.0
  %v2521 = vmax.f32 %v1775, 0.0
  %v2522 = vmax.f32 %v1780, 0.0
  %v2523 = vmax.f32 %v1785, 0.0
  %v2524 = vmax.f32 %v1790, 0.0
  %v2525 = vmax.f32 %v1795, 0.0
  %v2526 = vmax.f32 %v1800, 0.0
  %v2527 = vmax.f32 %v1805, 0.0
  %v2528 = vmax.f32 %v1810, 0.0
  %v2529 = vmax.f32 %v1815, 0.0
  %v2530 = vmax.f32 %v1820, 0.0
  %v2531 = vmax.f32 %v1825, 0.0
  %v2532 = vmax.f32 %v1830, 0.0
  %v2533 = vmax.f32 %v1835, 0.0
  %v2534 = vmax.f32 %v1840, 0.0
  %v2535 = vmax.f32 %v1845, 0.0
  %v2536 = vmax.f32 %v1850, 0.0
  %v2537 = vmax.f32 %v1855, 0.0
  %v2538 = vmax.f32 %v1860, 0.0
  %v2539 = vmax.f32 %v1865, 0.0
  %v2540 = vmax.f32 %v1870, 0.0
  %v2541 = vmax.f32 %v1875, 0.0
  %v2542 = vmax.f32 %v1880, 0.0
  %v2543 = vmax.f32 %v1885, 0.0
  %v2544 = vmax.f32 %v1890, 0.0
  %v2545 = vmax.f32 %v1895, 0.0
  %v2546 = vmax.f32 %v1900, 0.0
  %v2547 = vmax.f32 %v1905, 0.0
  %v2548 = vmax.f32 %v1910, 0.0
  %v2549 = vmax.f32 %v1915, 0.0
  %v2550 = vmax.f32 %v1920, 0.0
  %v2551 = vmax.f32 %v1925, 0.0
  %v2552 = vmax.f32 %v1930, 0.0
  %v2553 = vmax.f32 %v1935, 0.0
  %v2554 = vmax.f32 %v1940, 0.0
  %v2555 = vmax.f32 %v1945, 0.0
  %v2556 = vmax.f32 %v1950, 0.0
  %v2557 = vmax.f32 %v1955, 0.0
  %v2558 = vmax.f32 %v1960, 0.0
  %v2559 = vmax.f32 %v1965, 0.0
  %v2560 = vmax.f32 %v1970, 0.0
  %v2561 = vmax.f32 %v1975, 0.0
  %v2562 = vmax.f32 %v1980, 0.0
  %v2563 = vmax.f32 %v1985, 0.0
  %v2564 = vmax.f32 %v1990, 0.0
  %v2565 = vmax.f32 %v1995, 0.0
  %v2566 = vmax.f32 %v2000, 0.0
  %v2567 = vmax.f32 %v2005, 0.0
  %v2568 = vmax.f32 %v2010, 0.0
  %v2569 = vmax.f32 %v2015, 0.0
  %v2570 = vmax.f32 %v2020, 0.0
  %v2571 = vmax.f32 %v2025, 0.0
  %v2572 = vmax.f32 %v2030, 0.0
  %v2573 = vmax.f32 %v2035, 0.0
  %v2574 = vmax.f32 %v2040, 0.0
  %v2575 = vmax.f32 %v2045, 0.0
  %v2576 = vmax.f32 %v2050, 0.0
  %v2577 = vmax.f32 %v2055, 0.0
  %v2578 = vmax.f32 %v2060, 0.0
  %v2579 = vmax.f32 %v2065, 0.0
  %v2580 = vmax.f32 %v2070, 0.0
  %v2581 = vmax.f32 %v2075, 0.0
  %v2582 = vmax.f32 %v2080, 0.0
  %v2583 = vmax.f32 %v2085, 0.0
  %v2584 = vmax.f32 %v2090, 0.0
  %v2585 = vmax.f32 %v2095, 0.0
  %v2586 = vmax.f32 %v2100, 0.0
  %v2587 = vmax.f32 %v2105, 0.0
  %v2588 = vmax.f32 %v2110, 0.0
  %v2589 = vmax.f32 %v2115, 0.0
  %v2590 = vmax.f32 %v2120, 0.0
  %v2591 = vmax.f32 %v2125, 0.0
  %v2592 = vmax.f32 %v2130, 0.0
  %v2593 = vmax.f32 %v2135, 0.0
  %v2594 = vmax.f32 %v2140, 0.0
  %v2595 = vmax.f32 %v2145, 0.0
  %v2596 = vmax.f32 %v2150, 0.0
  %v2597 = vmax.f32 %v2155, 0.0
  %v2598 = vmax.f32 %v2160, 0.0
  %v2599 = vmax.f32 %v2165, 0.0
  %v2600 = vmax.f32 %v2170, 0.0
  %v2601 = vmax.f32 %v2175, 0.0
  %v2602 = vmax.f32 %v2180, 0.0
  %v2603 = vmax.f32 %v2185, 0.0
  %v2604 = vmax.f32 %v2190, 0.0
  %v2605 = vmax.f32 %v2195, 0.0
  %v2606 = vmax.f32 %v2200, 0.0
  %v2607 = vmax.f32 %v2205, 0.0
  %v2608 = vmax.f32 %v2210, 0.0
  %v2609 = vmax.f32 %v2215, 0.0
  %v2610 = vmax.f32 %v2220, 0.0
  %v2611 = vmax.f32 %v2225, 0.0
  %v2612 = vmax.f32 %v2230, 0.0
  %v2613 = vmax.f32 %v2235, 0.0
  %v2614 = vmax.f32 %v2240, 0.0
  %v2615 = vmax.f32 %v2245, 0.0
  %v2616 = vmax.f32 %v2250, 0.0
  %v2617 = vmax.f32 %v2255, 0.0
  %v2618 = vmax.f32 %v2260, 0.0
  %v2619 = vmax.f32 %v2265, 0.0
  %v2620 = vmax.f32 %v2270, 0.0
  %v2621 = vmax.f32 %v2275, 0.0
  %v2622 = vmax.f32 %v2280, 0.0
  %v2623 = vmax.f32 %v2285, 0.0
  %v2624 = vmax.f32 %v2290, 0.0
  %v2625 = vmax.f32 %v2295, 0.0
  %v2626 = vmax.f32 %v2300, 0.0
  %v2627 = vmax.f32 %v2305, 0.0
  %v2628 = vmax.f32 %v2310, 0.0
  %v2629 = vmax.f32 %v2315, 0.0
  %v2630 = vmax.f32 %v2320, 0.0
  %v2631 = vmax.f32 %v2325, 0.0
  %v2632 = vmax.f32 %v2330, 0.0
  %v2633 = vmax.f32 %v2335, 0.0
  %v2634 = vmax.f32 %v2340, 0.0
  %v2635 = vmax.f32 %v2345, 0.0
  %v2636 = vmax.f32 %v2350, 0.0
  %v2637 = vmax.f32 %v2355, 0.0
  %v2638 = vmax.f32 %v2360, 0.0
  %v2639 = vmax.f32 %v2365, 0.0
  %v2640 = vmax.f32 %v2370, 0.0
  %v2641 = vmax.f32 %v2375, 0.0
  %v2642 = vmax.f32 %v2380, 0.0
  %v2643 = vmax.f32 %v2385, 0.0
  %vm2644 = vcmask 523264
  %v2645 = vsel %vm2644, %v2388, -inf
  %v2646 = vsel %vm2644, %v2389, -inf
  %v2647 = vmax.f32 %v2645, %v2646
  %v2648 = vsel %vm2644, %v2390, -inf
  %v2649 = vmax.f32 %v2647, %v2648
  %v2650 = vsel %vm2644, %v2391, -inf
  %v2651 = vmax.f32 %v2649, %v2650
  %v2652 = vsel %vm2644, %v2392, -inf
  %v2653 = vmax.f32 %v2651, %v2652
  %v2654 = vsel %vm2644, %v2393, -inf
  %v2655 = vmax.f32 %v2653, %v2654
  %v2656 = vsel %vm2644, %v2394, -inf
  %v2657 = vmax.f32 %v2655, %v2656
  %v2658 = vsel %vm2644, %v2395, -inf
  %v2659 = vmax.f32 %v2657, %v2658
  %v2660 = vsel %vm2644, %v2396, -inf
  %v2661 = vmax.f32 %v2659, %v2660
  %v2662 = vsel %vm2644, %v2397, -inf
  %v2663 = vmax.f32 %v2661, %v2662
  %v2664 = vsel %vm2644, %v2398, -inf
  %v2665 = vmax.f32 %v2663, %v2664
  %v2666 = vsel %vm2644, %v2399, -inf
  %v2667 = vmax.f32 %v2665, %v2666
  %v2668 = vsel %vm2644, %v2400, -inf
  %v2669 = vmax.f32 %v2667, %v2668
  %v2670 = vsel %vm2644, %v2401, -inf
  %v2671 = vmax.f32 %v2669, %v2670
  %v2672 = vsel %vm2644, %v2402, -inf
  %v2673 = vmax.f32 %v2671, %v2672
  %v2674 = vsel %vm2644, %v2403, -inf
  %v2675 = vmax.f32 %v2673, %v2674
  %v2676 = vsel %vm2644, %v2404, -inf
  %v2677 = vmax.f32 %v2675, %v2676
  %v2678 = vsel %vm2644, %v2405, -inf
  %v2679 = vmax.f32 %v2677, %v2678
  %v2680 = vsel %vm2644, %v2406, -inf
  %v2681 = vmax.f32 %v2679, %v2680
  %v2682 = vsel %vm2644, %v2407, -inf
  %v2683 = vmax.f32 %v2681, %v2682
  %v2684 = vsel %vm2644, %v2408, -inf
  %v2685 = vmax.f32 %v2683, %v2684
  %v2686 = vsel %vm2644, %v2409, -inf
  %v2687 = vmax.f32 %v2685, %v2686
  %v2688 = vsel %vm2644, %v2410, -inf
  %v2689 = vmax.f32 %v2687, %v2688
  %v2690 = vsel %vm2644, %v2411, -inf
  %v2691 = vmax.f32 %v2689, %v2690
  %v2692 = vsel %vm2644, %v2412, -inf
  %v2693 = vmax.f32 %v2691, %v2692
  %v2694 = vsel %vm2644, %v2413, -inf
  %v2695 = vmax.f32 %v2693, %v2694
  %v2696 = vsel %vm2644, %v2414, -inf
  %v2697 = vmax.f32 %v2695, %v2696
  %v2698 = vsel %vm2644, %v2415, -inf
  %v2699 = vmax.f32 %v2697, %v2698
  %v2700 = vsel %vm2644, %v2416, -inf
  %v2701 = vmax.f32 %v2699, %v2700
  %v2702 = vsel %vm2644, %v2417, -inf
  %v2703 = vmax.f32 %v2701, %v2702
  %v2704 = vsel %vm2644, %v2418, -inf
  %v2705 = vmax.f32 %v2703, %v2704
  %v2706 = vsel %vm2644, %v2419, -inf
  %v2707 = vmax.f32 %v2705, %v2706
  %v2708 = vrot.slane %v2707, 4
  %v2709 = vmax.f32 %v2707, %v2708
  %v2710 = vrot.slane %v2709, 2
  %v2711 = vmax.f32 %v2709, %v2710
  %v2712 = vrot.slane %v2711, 1
  %v2713 = vmax.f32 %v2711, %v2712
  %v2714 = vsel %vm2644, %v2420, -inf
  %v2715 = vsel %vm2644, %v2421, -inf
  %v2716 = vmax.f32 %v2714, %v2715
  %v2717 = vsel %vm2644, %v2422, -inf
  %v2718 = vmax.f32 %v2716, %v2717
  %v2719 = vsel %vm2644, %v2423, -inf
  %v2720 = vmax.f32 %v2718, %v2719
  %v2721 = vsel %vm2644, %v2424, -inf
  %v2722 = vmax.f32 %v2720, %v2721
  %v2723 = vsel %vm2644, %v2425, -inf
  %v2724 = vmax.f32 %v2722, %v2723
  %v2725 = vsel %vm2644, %v2426, -inf
  %v2726 = vmax.f32 %v2724, %v2725
  %v2727 = vsel %vm2644, %v2427, -inf
  %v2728 = vmax.f32 %v2726, %v2727
  %v2729 = vsel %vm2644, %v2428, -inf
  %v2730 = vmax.f32 %v2728, %v2729
  %v2731 = vsel %vm2644, %v2429, -inf
  %v2732 = vmax.f32 %v2730, %v2731
  %v2733 = vsel %vm2644, %v2430, -inf
  %v2734 = vmax.f32 %v2732, %v2733
  %v2735 = vsel %vm2644, %v2431, -inf
  %v2736 = vmax.f32 %v2734, %v2735
  %v2737 = vsel %vm2644, %v2432, -inf
  %v2738 = vmax.f32 %v2736, %v2737
  %v2739 = vsel %vm2644, %v2433, -inf
  %v2740 = vmax.f32 %v2738, %v2739
  %v2741 = vsel %vm2644, %v2434, -inf
  %v2742 = vmax.f32 %v2740, %v2741
  %v2743 = vsel %vm2644, %v2435, -inf
  %v2744 = vmax.f32 %v2742, %v2743
  %v2745 = vsel %vm2644, %v2436, -inf
  %v2746 = vmax.f32 %v2744, %v2745
  %v2747 = vsel %vm2644, %v2437, -inf
  %v2748 = vmax.f32 %v2746, %v2747
  %v2749 = vsel %vm2644, %v2438, -inf
  %v2750 = vmax.f32 %v2748, %v2749
  %v2751 = vsel %vm2644, %v2439, -inf
  %v2752 = vmax.f32 %v2750, %v2751
  %v2753 = vsel %vm2644, %v2440, -inf
  %v2754 = vmax.f32 %v2752, %v2753
  %v2755 = vsel %vm2644, %v2441, -inf
  %v2756 = vmax.f32 %v2754, %v2755
  %v2757 = vsel %vm2644, %v2442, -inf
  %v2758 = vmax.f32 %v2756, %v2757
  %v2759 = vsel %vm2644, %v2443, -inf
  %v2760 = vmax.f32 %v2758, %v2759
  %v2761 = vsel %vm2644, %v2444, -inf
  %v2762 = vmax.f32 %v2760, %v2761
  %v2763 = vsel %vm2644, %v2445, -inf
  %v2764 = vmax.f32 %v2762, %v2763
  %v2765 = vsel %vm2644, %v2446, -inf
  %v2766 = vmax.f32 %v2764, %v2765
  %v2767 = vsel %vm2644, %v2447, -inf
  %v2768 = vmax.f32 %v2766, %v2767
  %v2769 = vsel %vm2644, %v2448, -inf
  %v2770 = vmax.f32 %v2768, %v2769
  %v2771 = vsel %vm2644, %v2449, -inf
  %v2772 = vmax.f32 %v2770, %v2771
  %v2773 = vsel %vm2644, %v2450, -inf
  %v2774 = vmax.f32 %v2772, %v2773
  %v2775 = vsel %vm2644, %v2451, -inf
  %v2776 = vmax.f32 %v2774, %v2775
  %v2777 = vrot.slane %v2776, 4
  %v2778 = vmax.f32 %v2776, %v2777
  %v2779 = vrot.slane %v2778, 2
  %v2780 = vmax.f32 %v2778, %v2779
  %v2781 = vrot.slane %v2780, 1
  %v2782 = vmax.f32 %v2780, %v2781
  %v2783 = vsel %vm2644, %v2452, -inf
  %v2784 = vsel %vm2644, %v2453, -inf
  %v2785 = vmax.f32 %v2783, %v2784
  %v2786 = vsel %vm2644, %v2454, -inf
  %v2787 = vmax.f32 %v2785, %v2786
  %v2788 = vsel %vm2644, %v2455, -inf
  %v2789 = vmax.f32 %v2787, %v2788
  %v2790 = vsel %vm2644, %v2456, -inf
  %v2791 = vmax.f32 %v2789, %v2790
  %v2792 = vsel %vm2644, %v2457, -inf
  %v2793 = vmax.f32 %v2791, %v2792
  %v2794 = vsel %vm2644, %v2458, -inf
  %v2795 = vmax.f32 %v2793, %v2794
  %v2796 = vsel %vm2644, %v2459, -inf
  %v2797 = vmax.f32 %v2795, %v2796
  %v2798 = vsel %vm2644, %v2460, -inf
  %v2799 = vmax.f32 %v2797, %v2798
  %v2800 = vsel %vm2644, %v2461, -inf
  %v2801 = vmax.f32 %v2799, %v2800
  %v2802 = vsel %vm2644, %v2462, -inf
  %v2803 = vmax.f32 %v2801, %v2802
  %v2804 = vsel %vm2644, %v2463, -inf
  %v2805 = vmax.f32 %v2803, %v2804
  %v2806 = vsel %vm2644, %v2464, -inf
  %v2807 = vmax.f32 %v2805, %v2806
  %v2808 = vsel %vm2644, %v2465, -inf
  %v2809 = vmax.f32 %v2807, %v2808
  %v2810 = vsel %vm2644, %v2466, -inf
  %v2811 = vmax.f32 %v2809, %v2810
  %v2812 = vsel %vm2644, %v2467, -inf
  %v2813 = vmax.f32 %v2811, %v2812
  %v2814 = vsel %vm2644, %v2468, -inf
  %v2815 = vmax.f32 %v2813, %v2814
  %v2816 = vsel %vm2644, %v2469, -inf
  %v2817 = vmax.f32 %v2815, %v2816
  %v2818 = vsel %vm2644, %v2470, -inf
  %v2819 = vmax.f32 %v2817, %v2818
  %v2820 = vsel %vm2644, %v2471, -inf
  %v2821 = vmax.f32 %v2819, %v2820
  %v2822 = vsel %vm2644, %v2472, -inf
  %v2823 = vmax.f32 %v2821, %v2822
  %v2824 = vsel %vm2644, %v2473, -inf
  %v2825 = vmax.f32 %v2823, %v2824
  %v2826 = vsel %vm2644, %v2474, -inf
  %v2827 = vmax.f32 %v2825, %v2826
  %v2828 = vsel %vm2644, %v2475, -inf
  %v2829 = vmax.f32 %v2827, %v2828
  %v2830 = vsel %vm2644, %v2476, -inf
  %v2831 = vmax.f32 %v2829, %v2830
  %v2832 = vsel %vm2644, %v2477, -inf
  %v2833 = vmax.f32 %v2831, %v2832
  %v2834 = vsel %vm2644, %v2478, -inf
  %v2835 = vmax.f32 %v2833, %v2834
  %v2836 = vsel %vm2644, %v2479, -inf
  %v2837 = vmax.f32 %v2835, %v2836
  %v2838 = vsel %vm2644, %v2480, -inf
  %v2839 = vmax.f32 %v2837, %v2838
  %v2840 = vsel %vm2644, %v2481, -inf
  %v2841 = vmax.f32 %v2839, %v2840
  %v2842 = vsel %vm2644, %v2482, -inf
  %v2843 = vmax.f32 %v2841, %v2842
  %v2844 = vsel %vm2644, %v2483, -inf
  %v2845 = vmax.f32 %v2843, %v2844
  %v2846 = vrot.slane %v2845, 4
  %v2847 = vmax.f32 %v2845, %v2846
  %v2848 = vrot.slane %v2847, 2
  %v2849 = vmax.f32 %v2847, %v2848
  %v2850 = vrot.slane %v2849, 1
  %v2851 = vmax.f32 %v2849, %v2850
  %v2852 = vsel %vm2644, %v2484, -inf
  %v2853 = vsel %vm2644, %v2485, -inf
  %v2854 = vmax.f32 %v2852, %v2853
  %v2855 = vsel %vm2644, %v2486, -inf
  %v2856 = vmax.f32 %v2854, %v2855
  %v2857 = vsel %vm2644, %v2487, -inf
  %v2858 = vmax.f32 %v2856, %v2857
  %v2859 = vsel %vm2644, %v2488, -inf
  %v2860 = vmax.f32 %v2858, %v2859
  %v2861 = vsel %vm2644, %v2489, -inf
  %v2862 = vmax.f32 %v2860, %v2861
  %v2863 = vsel %vm2644, %v2490, -inf
  %v2864 = vmax.f32 %v2862, %v2863
  %v2865 = vsel %vm2644, %v2491, -inf
  %v2866 = vmax.f32 %v2864, %v2865
  %v2867 = vsel %vm2644, %v2492, -inf
  %v2868 = vmax.f32 %v2866, %v2867
  %v2869 = vsel %vm2644, %v2493, -inf
  %v2870 = vmax.f32 %v2868, %v2869
  %v2871 = vsel %vm2644, %v2494, -inf
  %v2872 = vmax.f32 %v2870, %v2871
  %v2873 = vsel %vm2644, %v2495, -inf
  %v2874 = vmax.f32 %v2872, %v2873
  %v2875 = vsel %vm2644, %v2496, -inf
  %v2876 = vmax.f32 %v2874, %v2875
  %v2877 = vsel %vm2644, %v2497, -inf
  %v2878 = vmax.f32 %v2876, %v2877
  %v2879 = vsel %vm2644, %v2498, -inf
  %v2880 = vmax.f32 %v2878, %v2879
  %v2881 = vsel %vm2644, %v2499, -inf
  %v2882 = vmax.f32 %v2880, %v2881
  %v2883 = vsel %vm2644, %v2500, -inf
  %v2884 = vmax.f32 %v2882, %v2883
  %v2885 = vsel %vm2644, %v2501, -inf
  %v2886 = vmax.f32 %v2884, %v2885
  %v2887 = vsel %vm2644, %v2502, -inf
  %v2888 = vmax.f32 %v2886, %v2887
  %v2889 = vsel %vm2644, %v2503, -inf
  %v2890 = vmax.f32 %v2888, %v2889
  %v2891 = vsel %vm2644, %v2504, -inf
  %v2892 = vmax.f32 %v2890, %v2891
  %v2893 = vsel %vm2644, %v2505, -inf
  %v2894 = vmax.f32 %v2892, %v2893
  %v2895 = vsel %vm2644, %v2506, -inf
  %v2896 = vmax.f32 %v2894, %v2895
  %v2897 = vsel %vm2644, %v2507, -inf
  %v2898 = vmax.f32 %v2896, %v2897
  %v2899 = vsel %vm2644, %v2508, -inf
  %v2900 = vmax.f32 %v2898, %v2899
  %v2901 = vsel %vm2644, %v2509, -inf
  %v2902 = vmax.f32 %v2900, %v2901
  %v2903 = vsel %vm2644, %v2510, -inf
  %v2904 = vmax.f32 %v2902, %v2903
  %v2905 = vsel %vm2644, %v2511, -inf
  %v2906 = vmax.f32 %v2904, %v2905
  %v2907 = vsel %vm2644, %v2512, -inf
  %v2908 = vmax.f32 %v2906, %v2907
  %v2909 = vsel %vm2644, %v2513, -inf
  %v2910 = vmax.f32 %v2908, %v2909
  %v2911 = vsel %vm2644, %v2514, -inf
  %v2912 = vmax.f32 %v2910, %v2911
  %v2913 = vsel %vm2644, %v2515, -inf
  %v2914 = vmax.f32 %v2912, %v2913
  %v2915 = vrot.slane %v2914, 4
  %v2916 = vmax.f32 %v2914, %v2915
  %v2917 = vrot.slane %v2916, 2
  %v2918 = vmax.f32 %v2916, %v2917
  %v2919 = vrot.slane %v2918, 1
  %v2920 = vmax.f32 %v2918, %v2919
  %v2921 = vsel %vm2644, %v2516, -inf
  %v2922 = vsel %vm2644, %v2517, -inf
  %v2923 = vmax.f32 %v2921, %v2922
  %v2924 = vsel %vm2644, %v2518, -inf
  %v2925 = vmax.f32 %v2923, %v2924
  %v2926 = vsel %vm2644, %v2519, -inf
  %v2927 = vmax.f32 %v2925, %v2926
  %v2928 = vsel %vm2644, %v2520, -inf
  %v2929 = vmax.f32 %v2927, %v2928
  %v2930 = vsel %vm2644, %v2521, -inf
  %v2931 = vmax.f32 %v2929, %v2930
  %v2932 = vsel %vm2644, %v2522, -inf
  %v2933 = vmax.f32 %v2931, %v2932
  %v2934 = vsel %vm2644, %v2523, -inf
  %v2935 = vmax.f32 %v2933, %v2934
  %v2936 = vsel %vm2644, %v2524, -inf
  %v2937 = vmax.f32 %v2935, %v2936
  %v2938 = vsel %vm2644, %v2525, -inf
  %v2939 = vmax.f32 %v2937, %v2938
  %v2940 = vsel %vm2644, %v2526, -inf
  %v2941 = vmax.f32 %v2939, %v2940
  %v2942 = vsel %vm2644, %v2527, -inf
  %v2943 = vmax.f32 %v2941, %v2942
  %v2944 = vsel %vm2644, %v2528, -inf
  %v2945 = vmax.f32 %v2943, %v2944
  %v2946 = vsel %vm2644, %v2529, -inf
  %v2947 = vmax.f32 %v2945, %v2946
  %v2948 = vsel %vm2644, %v2530, -inf
  %v2949 = vmax.f32 %v2947, %v2948
  %v2950 = vsel %vm2644, %v2531, -inf
  %v2951 = vmax.f32 %v2949, %v2950
  %v2952 = vsel %vm2644, %v2532, -inf
  %v2953 = vmax.f32 %v2951, %v2952
  %v2954 = vsel %vm2644, %v2533, -inf
  %v2955 = vmax.f32 %v2953, %v2954
  %v2956 = vsel %vm2644, %v2534, -inf
  %v2957 = vmax.f32 %v2955, %v2956
  %v2958 = vsel %vm2644, %v2535, -inf
  %v2959 = vmax.f32 %v2957, %v2958
  %v2960 = vsel %vm2644, %v2536, -inf
  %v2961 = vmax.f32 %v2959, %v2960
  %v2962 = vsel %vm2644, %v2537, -inf
  %v2963 = vmax.f32 %v2961, %v2962
  %v2964 = vsel %vm2644, %v2538, -inf
  %v2965 = vmax.f32 %v2963, %v2964
  %v2966 = vsel %vm2644, %v2539, -inf
  %v2967 = vmax.f32 %v2965, %v2966
  %v2968 = vsel %vm2644, %v2540, -inf
  %v2969 = vmax.f32 %v2967, %v2968
  %v2970 = vsel %vm2644, %v2541, -inf
  %v2971 = vmax.f32 %v2969, %v2970
  %v2972 = vsel %vm2644, %v2542, -inf
  %v2973 = vmax.f32 %v2971, %v2972
  %v2974 = vsel %vm2644, %v2543, -inf
  %v2975 = vmax.f32 %v2973, %v2974
  %v2976 = vsel %vm2644, %v2544, -inf
  %v2977 = vmax.f32 %v2975, %v2976
  %v2978 = vsel %vm2644, %v2545, -inf
  %v2979 = vmax.f32 %v2977, %v2978
  %v2980 = vsel %vm2644, %v2546, -inf
  %v2981 = vmax.f32 %v2979, %v2980
  %v2982 = vsel %vm2644, %v2547, -inf
  %v2983 = vmax.f32 %v2981, %v2982
  %v2984 = vrot.slane %v2983, 4
  %v2985 = vmax.f32 %v2983, %v2984
  %v2986 = vrot.slane %v2985, 2
  %v2987 = vmax.f32 %v2985, %v2986
  %v2988 = vrot.slane %v2987, 1
  %v2989 = vmax.f32 %v2987, %v2988
  %v2990 = vsel %vm2644, %v2548, -inf
  %v2991 = vsel %vm2644, %v2549, -inf
  %v2992 = vmax.f32 %v2990, %v2991
  %v2993 = vsel %vm2644, %v2550, -inf
  %v2994 = vmax.f32 %v2992, %v2993
  %v2995 = vsel %vm2644, %v2551, -inf
  %v2996 = vmax.f32 %v2994, %v2995
  %v2997 = vsel %vm2644, %v2552, -inf
  %v2998 = vmax.f32 %v2996, %v2997
  %v2999 = vsel %vm2644, %v2553, -inf
  %v3000 = vmax.f32 %v2998, %v2999
  %v3001 = vsel %vm2644, %v2554, -inf
  %v3002 = vmax.f32 %v3000, %v3001
  %v3003 = vsel %vm2644, %v2555, -inf
  %v3004 = vmax.f32 %v3002, %v3003
  %v3005 = vsel %vm2644, %v2556, -inf
  %v3006 = vmax.f32 %v3004, %v3005
  %v3007 = vsel %vm2644, %v2557, -inf
  %v3008 = vmax.f32 %v3006, %v3007
  %v3009 = vsel %vm2644, %v2558, -inf
  %v3010 = vmax.f32 %v3008, %v3009
  %v3011 = vsel %vm2644, %v2559, -inf
  %v3012 = vmax.f32 %v3010, %v3011
  %v3013 = vsel %vm2644, %v2560, -inf
  %v3014 = vmax.f32 %v3012, %v3013
  %v3015 = vsel %vm2644, %v2561, -inf
  %v3016 = vmax.f32 %v3014, %v3015
  %v3017 = vsel %vm2644, %v2562, -inf
  %v3018 = vmax.f32 %v3016, %v3017
  %v3019 = vsel %vm2644, %v2563, -inf
  %v3020 = vmax.f32 %v3018, %v3019
  %v3021 = vsel %vm2644, %v2564, -inf
  %v3022 = vmax.f32 %v3020, %v3021
  %v3023 = vsel %vm2644, %v2565, -inf
  %v3024 = vmax.f32 %v3022, %v3023
  %v3025 = vsel %vm2644, %v2566, -inf
  %v3026 = vmax.f32 %v3024, %v3025
  %v3027 = vsel %vm2644, %v2567, -inf
  %v3028 = vmax.f32 %v3026, %v3027
  %v3029 = vsel %vm2644, %v2568, -inf
  %v3030 = vmax.f32 %v3028, %v3029
  %v3031 = vsel %vm2644, %v2569, -inf
  %v3032 = vmax.f32 %v3030, %v3031
  %v3033 = vsel %vm2644, %v2570, -inf
  %v3034 = vmax.f32 %v3032, %v3033
  %v3035 = vsel %vm2644, %v2571, -inf
  %v3036 = vmax.f32 %v3034, %v3035
  %v3037 = vsel %vm2644, %v2572, -inf
  %v3038 = vmax.f32 %v3036, %v3037
  %v3039 = vsel %vm2644, %v2573, -inf
  %v3040 = vmax.f32 %v3038, %v3039
  %v3041 = vsel %vm2644, %v2574, -inf
  %v3042 = vmax.f32 %v3040, %v3041
  %v3043 = vsel %vm2644, %v2575, -inf
  %v3044 = vmax.f32 %v3042, %v3043
  %v3045 = vsel %vm2644, %v2576, -inf
  %v3046 = vmax.f32 %v3044, %v3045
  %v3047 = vsel %vm2644, %v2577, -inf
  %v3048 = vmax.f32 %v3046, %v3047
  %v3049 = vsel %vm2644, %v2578, -inf
  %v3050 = vmax.f32 %v3048, %v3049
  %v3051 = vsel %vm2644, %v2579, -inf
  %v3052 = vmax.f32 %v3050, %v3051
  %v3053 = vrot.slane %v3052, 4
  %v3054 = vmax.f32 %v3052, %v3053
  %v3055 = vrot.slane %v3054, 2
  %v3056 = vmax.f32 %v3054, %v3055
  %v3057 = vrot.slane %v3056, 1
  %v3058 = vmax.f32 %v3056, %v3057
  %v3059 = vsel %vm2644, %v2580, -inf
  %v3060 = vsel %vm2644, %v2581, -inf
  %v3061 = vmax.f32 %v3059, %v3060
  %v3062 = vsel %vm2644, %v2582, -inf
  %v3063 = vmax.f32 %v3061, %v3062
  %v3064 = vsel %vm2644, %v2583, -inf
  %v3065 = vmax.f32 %v3063, %v3064
  %v3066 = vsel %vm2644, %v2584, -inf
  %v3067 = vmax.f32 %v3065, %v3066
  %v3068 = vsel %vm2644, %v2585, -inf
  %v3069 = vmax.f32 %v3067, %v3068
  %v3070 = vsel %vm2644, %v2586, -inf
  %v3071 = vmax.f32 %v3069, %v3070
  %v3072 = vsel %vm2644, %v2587, -inf
  %v3073 = vmax.f32 %v3071, %v3072
  %v3074 = vsel %vm2644, %v2588, -inf
  %v3075 = vmax.f32 %v3073, %v3074
  %v3076 = vsel %vm2644, %v2589, -inf
  %v3077 = vmax.f32 %v3075, %v3076
  %v3078 = vsel %vm2644, %v2590, -inf
  %v3079 = vmax.f32 %v3077, %v3078
  %v3080 = vsel %vm2644, %v2591, -inf
  %v3081 = vmax.f32 %v3079, %v3080
  %v3082 = vsel %vm2644, %v2592, -inf
  %v3083 = vmax.f32 %v3081, %v3082
  %v3084 = vsel %vm2644, %v2593, -inf
  %v3085 = vmax.f32 %v3083, %v3084
  %v3086 = vsel %vm2644, %v2594, -inf
  %v3087 = vmax.f32 %v3085, %v3086
  %v3088 = vsel %vm2644, %v2595, -inf
  %v3089 = vmax.f32 %v3087, %v3088
  %v3090 = vsel %vm2644, %v2596, -inf
  %v3091 = vmax.f32 %v3089, %v3090
  %v3092 = vsel %vm2644, %v2597, -inf
  %v3093 = vmax.f32 %v3091, %v3092
  %v3094 = vsel %vm2644, %v2598, -inf
  %v3095 = vmax.f32 %v3093, %v3094
  %v3096 = vsel %vm2644, %v2599, -inf
  %v3097 = vmax.f32 %v3095, %v3096
  %v3098 = vsel %vm2644, %v2600, -inf
  %v3099 = vmax.f32 %v3097, %v3098
  %v3100 = vsel %vm2644, %v2601, -inf
  %v3101 = vmax.f32 %v3099, %v3100
  %v3102 = vsel %vm2644, %v2602, -inf
  %v3103 = vmax.f32 %v3101, %v3102
  %v3104 = vsel %vm2644, %v2603, -inf
  %v3105 = vmax.f32 %v3103, %v3104
  %v3106 = vsel %vm2644, %v2604, -inf
  %v3107 = vmax.f32 %v3105, %v3106
  %v3108 = vsel %vm2644, %v2605, -inf
  %v3109 = vmax.f32 %v3107, %v3108
  %v3110 = vsel %vm2644, %v2606, -inf
  %v3111 = vmax.f32 %v3109, %v3110
  %v3112 = vsel %vm2644, %v2607, -inf
  %v3113 = vmax.f32 %v3111, %v3112
  %v3114 = vsel %vm2644, %v2608, -inf
  %v3115 = vmax.f32 %v3113, %v3114
  %v3116 = vsel %vm2644, %v2609, -inf
  %v3117 = vmax.f32 %v3115, %v3116
  %v3118 = vsel %vm2644, %v2610, -inf
  %v3119 = vmax.f32 %v3117, %v3118
  %v3120 = vsel %vm2644, %v2611, -inf
  %v3121 = vmax.f32 %v3119, %v3120
  %v3122 = vrot.slane %v3121, 4
  %v3123 = vmax.f32 %v3121, %v3122
  %v3124 = vrot.slane %v3123, 2
  %v3125 = vmax.f32 %v3123, %v3124
  %v3126 = vrot.slane %v3125, 1
  %v3127 = vmax.f32 %v3125, %v3126
  %v3128 = vsel %vm2644, %v2612, -inf
  %v3129 = vsel %vm2644, %v2613, -inf
  %v3130 = vmax.f32 %v3128, %v3129
  %v3131 = vsel %vm2644, %v2614, -inf
  %v3132 = vmax.f32 %v3130, %v3131
  %v3133 = vsel %vm2644, %v2615, -inf
  %v3134 = vmax.f32 %v3132, %v3133
  %v3135 = vsel %vm2644, %v2616, -inf
  %v3136 = vmax.f32 %v3134, %v3135
  %v3137 = vsel %vm2644, %v2617, -inf
  %v3138 = vmax.f32 %v3136, %v3137
  %v3139 = vsel %vm2644, %v2618, -inf
  %v3140 = vmax.f32 %v3138, %v3139
  %v3141 = vsel %vm2644, %v2619, -inf
  %v3142 = vmax.f32 %v3140, %v3141
  %v3143 = vsel %vm2644, %v2620, -inf
  %v3144 = vmax.f32 %v3142, %v3143
  %v3145 = vsel %vm2644, %v2621, -inf
  %v3146 = vmax.f32 %v3144, %v3145
  %v3147 = vsel %vm2644, %v2622, -inf
  %v3148 = vmax.f32 %v3146, %v3147
  %v3149 = vsel %vm2644, %v2623, -inf
  %v3150 = vmax.f32 %v3148, %v3149
  %v3151 = vsel %vm2644, %v2624, -inf
  %v3152 = vmax.f32 %v3150, %v3151
  %v3153 = vsel %vm2644, %v2625, -inf
  %v3154 = vmax.f32 %v3152, %v3153
  %v3155 = vsel %vm2644, %v2626, -inf
  %v3156 = vmax.f32 %v3154, %v3155
  %v3157 = vsel %vm2644, %v2627, -inf
  %v3158 = vmax.f32 %v3156, %v3157
  %v3159 = vsel %vm2644, %v2628, -inf
  %v3160 = vmax.f32 %v3158, %v3159
  %v3161 = vsel %vm2644, %v2629, -inf
  %v3162 = vmax.f32 %v3160, %v3161
  %v3163 = vsel %vm2644, %v2630, -inf
  %v3164 = vmax.f32 %v3162, %v3163
  %v3165 = vsel %vm2644, %v2631, -inf
  %v3166 = vmax.f32 %v3164, %v3165
  %v3167 = vsel %vm2644, %v2632, -inf
  %v3168 = vmax.f32 %v3166, %v3167
  %v3169 = vsel %vm2644, %v2633, -inf
  %v3170 = vmax.f32 %v3168, %v3169
  %v3171 = vsel %vm2644, %v2634, -inf
  %v3172 = vmax.f32 %v3170, %v3171
  %v3173 = vsel %vm2644, %v2635, -inf
  %v3174 = vmax.f32 %v3172, %v3173
  %v3175 = vsel %vm2644, %v2636, -inf
  %v3176 = vmax.f32 %v3174, %v3175
  %v3177 = vsel %vm2644, %v2637, -inf
  %v3178 = vmax.f32 %v3176, %v3177
  %v3179 = vsel %vm2644, %v2638, -inf
  %v3180 = vmax.f32 %v3178, %v3179
  %v3181 = vsel %vm2644, %v2639, -inf
  %v3182 = vmax.f32 %v3180, %v3181
  %v3183 = vsel %vm2644, %v2640, -inf
  %v3184 = vmax.f32 %v3182, %v3183
  %v3185 = vsel %vm2644, %v2641, -inf
  %v3186 = vmax.f32 %v3184, %v3185
  %v3187 = vsel %vm2644, %v2642, -inf
  %v3188 = vmax.f32 %v3186, %v3187
  %v3189 = vsel %vm2644, %v2643, -inf
  %v3190 = vmax.f32 %v3188, %v3189
  %v3191 = vrot.slane %v3190, 4
  %v3192 = vmax.f32 %v3190, %v3191
  %v3193 = vrot.slane %v3192, 2
  %v3194 = vmax.f32 %v3192, %v3193
  %v3195 = vrot.slane %v3194, 1
  %v3196 = vmax.f32 %v3194, %v3195
  %v3197 = vld [vmem:[%s2] sm:$0xff]
  %v3198 = vld [vmem:[%s2 + $0x8] sm:$0xff]
  %v3199 = vld [vmem:[%s2 + $0x10] sm:$0xff]
  %v3200 = vld [vmem:[%s2 + $0x18] sm:$0xff]
  %v3201 = vld [vmem:[%s2 + $0x20] sm:$0xff]
  %v3202 = vld [vmem:[%s2 + $0x28] sm:$0xff]
  %v3203 = vld [vmem:[%s2 + $0x30] sm:$0xff]
  %v3204 = vld [vmem:[%s2 + $0x38] sm:$0xff]
  %vm3213 = vcmask 1041409
  %v3214 = vsel %vm3213, %v2782, %v2713
  %vm3215 = vcmask 1042434
  %v3216 = vsel %vm3215, %v2851, %v3214
  %vm3217 = vcmask 1043459
  %v3218 = vsel %vm3217, %v2920, %v3216
  %vm3219 = vcmask 1044484
  %v3220 = vsel %vm3219, %v2989, %v3218
  %vm3221 = vcmask 1045509
  %v3222 = vsel %vm3221, %v3058, %v3220
  %vm3223 = vcmask 1046534
  %v3224 = vsel %vm3223, %v3127, %v3222
  %vm3225 = vcmask 1047559
  %v3226 = vsel %vm3225, %v3196, %v3224
  %v3227 = vsel %vm2644, %v3226, 0
  %3229 = vmatprep.subr.mxu0 0.0
  %3230 = vmatpush1.msra.mxu0 %v3197
  %3231 = vmatprep.subr.mxu0 0.0
  %3232 = vmatpush1.msra.mxu0 %v3198
  %3233 = vmatprep.subr.mxu0 0.0
  %3234 = vmatpush1.msra.mxu0 %v3199
  %3235 = vmatprep.subr.mxu0 0.0
  %3236 = vmatpush1.msra.mxu0 %v3200
  %3237 = vmatprep.subr.mxu0 0.0
  %3238 = vmatpush1.msra.mxu0 %v3201
  %3239 = vmatprep.subr.mxu0 0.0
  %3240 = vmatpush1.msra.mxu0 %v3202
  %3241 = vmatprep.subr.mxu0 0.0
  %3242 = vmatpush1.msra.mxu0 %v3203
  %3243 = vmatprep.subr.mxu0 0.0
  %3244 = vmatpush1.msra.mxu0 %v3204
  %3245 = vmatprep.subr.mxu0 0.0
  %3246 = vmatpush1.msra.mxu0 0.0
  %3247 = vmatprep.subr.mxu0 0.0
  %3248 = vmatpush1.msra.mxu0 0.0
  %3249 = vmatprep.subr.mxu0 0.0
  %3250 = vmatpush1.msra.mxu0 0.0
  %3251 = vmatprep.subr.mxu0 0.0
  %3252 = vmatpush1.msra.mxu0 0.0
  %3253 = vmatprep.subr.mxu0 0.0
  %3254 = vmatpush1.msra.mxu0 0.0
  %3255 = vmatprep.subr.mxu0 0.0
  %3256 = vmatpush1.msra.mxu0 0.0
  %3257 = vmatprep.subr.mxu0 0.0
  %3258 = vmatpush1.msra.mxu0 0.0
  %3259 = vmatprep.subr.mxu0 0.0
  %3260 = vmatpush1.msra.mxu0 0.0
  %3261 = vmatprep.subr.mxu0 0.0
  %3262 = vmatpush1.msra.mxu0 0.0
  %3263 = vmatprep.subr.mxu0 0.0
  %3264 = vmatpush1.msra.mxu0 0.0
  %3265 = vmatprep.subr.mxu0 0.0
  %3266 = vmatpush1.msra.mxu0 0.0
  %3267 = vmatprep.subr.mxu0 0.0
  %3268 = vmatpush1.msra.mxu0 0.0
  %3269 = vmatprep.subr.mxu0 0.0
  %3270 = vmatpush1.msra.mxu0 0.0
  %3271 = vmatprep.subr.mxu0 0.0
  %3272 = vmatpush1.msra.mxu0 0.0
  %3273 = vmatprep.subr.mxu0 0.0
  %3274 = vmatpush1.msra.mxu0 0.0
  %3275 = vmatprep.subr.mxu0 0.0
  %3276 = vmatpush1.msra.mxu0 0.0
  %3277 = vmatprep.subr.mxu0 0.0
  %3278 = vmatpush1.msra.mxu0 0.0
  %3279 = vmatprep.subr.mxu0 0.0
  %3280 = vmatpush1.msra.mxu0 0.0
  %3281 = vmatprep.subr.mxu0 0.0
  %3282 = vmatpush1.msra.mxu0 0.0
  %3283 = vmatprep.subr.mxu0 0.0
  %3284 = vmatpush1.msra.mxu0 0.0
  %3285 = vmatprep.subr.mxu0 0.0
  %3286 = vmatpush1.msra.mxu0 0.0
  %3287 = vmatprep.subr.mxu0 0.0
  %3288 = vmatpush1.msra.mxu0 0.0
  %3289 = vmatprep.subr.mxu0 0.0
  %3290 = vmatpush1.msra.mxu0 0.0
  %3291 = vmatprep.subr.mxu0 0.0
  %3292 = vmatpush1.msra.mxu0 0.0
  %3293 = vmatprep.mubr.f32.mxu0 0.0
  %3294 = vmatmul.mubr.f32.gmra.mrb[0].mxu0 %v3227
  %v3295 = vpop.f32.mrb[0].mxu0
  %v3296 = vadd.f32 0.0, %v3295
  %v3297 = vpop.f32.mrb[0].mxu0
  %3298 = vdwg.mxu0
  %vm3299 = vcmask 80896
  %3300 = vst.msk [vmem:[%s3] sm:$0xff] %vm3299, %v3296
  // Predicated region
  $region14: #{net_forward.1} parent=0 // pred_check
    _
  $region15: #{net_forward.1} parent=0 // pred_check_branch
    %3302 = sbr.rel (0) target = $region17
  $region16: #{net_forward.1} parent=0 // pred_region
    _
  $region17: #{net_forward.1} parent=0 // pred_fallthru
    _
  // Predicated region
  $region18: #{net_forward.1} parent=0 // pred_check
    _
  $region19: #{net_forward.1} parent=0 // pred_check_branch
    %3304 = sbr.rel (0) target = $region21
  $region20: #{net_forward.1} parent=0 // pred_region
    _
  $region21: #{net_forward.1} parent=0 // pred_fallthru
    _

</llo_original>
